<compile_context>
chip_gen: v7x
topology: tpu7x:2x2x1
jax: 0.10.0
libtpu: 0.0.40
codegen_flags: <defaults>
</compile_context>

<pallas_src>
import functools
import math

import numpy as np

import jax
import jax.numpy as jnp
from jax.experimental import pallas as pl
from jax.experimental.pallas import tpu as pltpu


_NEG_TWO_OVER_E = -2.0 / math.e
_HALLEY_ITERS = 4  # cubically convergent; 4 steps ~ f32-exact for y >= -1/e


def _superloss_kernel(targets_ref, logits_ref, out_ref, *,
                      tau, lam, inv_lam, inv_batchsize, block_b, total_b):
    i = pl.program_id(0)

    logits = logits_ref[...].astype(jnp.float32)        # (bb, C) f32
    targets = targets_ref[...]                           # (bb, 1) int32
    bb, num_classes = logits.shape

    # ---- per-sample cross entropy (single shifted pass; the row max cancels) --
    m = jnp.max(logits, axis=-1, keepdims=True)                           # (bb,1)
    shifted = logits - m                                                  # (bb,C)
    sum_exp = jnp.sum(jnp.exp(shifted), axis=-1, keepdims=True)           # (bb,1)
    cls = jax.lax.broadcasted_iota(jnp.int32, (bb, num_classes), 1)
    tgt_shifted = jnp.sum(jnp.where(cls == targets, shifted, 0.0),
                          axis=-1, keepdims=True)                         # (bb,1)
    l_i = jnp.log(sum_exp) - tgt_shifted                                  # (bb,1)

    # ---- lane-dense relayout for the elementwise Lambert-W phase --------------
    rows = bb // 128
    l_i = l_i.reshape(rows, 128)

    # sigma(l_i) = exp(-W0(y)),  y = 0.5 * max(-2/e, (l_i - tau)/lam)
    y = 0.5 * jnp.maximum((l_i - tau) * inv_lam, _NEG_TWO_OVER_E)

    # Lambert W0 init: branch-point series for y<0, log1p otherwise.
    z = jnp.maximum(1.0 + math.e * y, 0.0)          # distance from branch point
    near_branch = z < 1e-5
    w_series = -1.0 + jnp.sqrt(2.0 * z) - (2.0 / 3.0) * z
    w = jnp.where(y < 0.0, w_series, jnp.log1p(jnp.maximum(y, 0.0)))

    # Halley iterations, merged to one divide per step:
    #   w -= f * 2*(w+1) / (2*e^w*(w+1)^2 - (w+2)*f),  f = w*e^w - y
    for it in range(_HALLEY_ITERS):
        ew = jnp.exp(w)
        f = w * ew - y
        wp1 = w + 1.0
        num = f * (2.0 * wp1)
        den = 2.0 * ew * wp1 * wp1 - (w + 2.0) * f
        den = jnp.where(jnp.abs(den) < 1e-30,
                        jnp.where(den < 0.0, -1e-30, 1e-30), den)
        if it < _HALLEY_ITERS - 1:
            step = num * pl.reciprocal(den, approx=True)   # EUP slot, self-correcting
        else:
            step = num / den                                # exact final correction
        w = jnp.where(near_branch, w, w - step)

    sigma = jnp.exp(-w)
    # log(sigma) == -w, so lam * log(sigma)**2 == lam * w*w (cheaper, more exact)
    loss_i = (l_i - tau) * sigma + lam * (w * w)

    # Mask rows past the true batch (undefined tail of a partial/padded block).
    if total_b % block_b != 0:
        sub = jax.lax.broadcasted_iota(jnp.int32, (rows, 128), 0)
        lane = jax.lax.broadcasted_iota(jnp.int32, (rows, 128), 1)
        row = i * block_b + sub * 128 + lane
        loss_i = jnp.where(row < total_b, loss_i, 0.0)

    partial = jnp.sum(loss_i, axis=0, keepdims=True) * inv_batchsize      # (1,128)

    # Per-grid-step partial tile (no revisited accumulator) -> the batch axis is
    # 'parallel' and can shard across both v7x TensorCores.  Row 0 of each
    # (8,128) out tile holds the per-lane partial; the wrapper sums everything.
    sub8 = jax.lax.broadcasted_iota(jnp.int32, (8, 128), 0)
    out_ref[...] = jnp.where(sub8 == 0, jnp.broadcast_to(partial, (8, 128)), 0.0)


def superloss(logits, targets, *, C=10, lam=2.0, batchsize=None,
              vmem_budget_bytes=10 * 1024 * 1024):
    """SuperLoss forward. logits: (B, num_classes), targets: (B,) int."""
    B, num_classes = logits.shape
    tau = math.log(C)
    if batchsize is None:
        batchsize = B  # stands in for config.valid_bs (valid=False path)

    # Tile rows from a VMEM byte budget: double-buffered input tile + f32 copy.
    in_bytes = jnp.dtype(logits.dtype).itemsize
    bytes_per_row = num_classes * (2 * in_bytes + 4) + 16
    bb = int(vmem_budget_bytes // bytes_per_row)
    bb = max(128, min(bb, 2048))
    bb = (bb // 128) * 128

    if B < 128:
        # Tiny batch: pad to one 128-row block (negligible traffic, masked rows).
        pad = 128 - B
        logits = jnp.pad(logits, ((0, pad), (0, 0)))
        targets = jnp.pad(targets, ((0, pad),))
        b_eff = 128
        bb = 128
    else:
        # Streamed path: no pad; ragged last block handled by the in-kernel mask.
        b_eff = B
        bb = min(bb, (B // 128) * 128)

    grid_b = pl.cdiv(b_eff, bb)
    targets2d = targets.astype(jnp.int32).reshape(b_eff, 1)

    kernel = functools.partial(
        _superloss_kernel,
        tau=float(tau), lam=float(lam), inv_lam=float(1.0 / lam),
        inv_batchsize=float(1.0 / batchsize), block_b=bb, total_b=B)

    partials = pl.pallas_call(
        kernel,
        out_shape=jax.ShapeDtypeStruct((grid_b * 8, 128), jnp.float32),
        grid=(grid_b,),
        in_specs=[
            pl.BlockSpec((bb, 1), lambda i: (i, 0)),             # int32 targets
            pl.BlockSpec((bb, num_classes), lambda i: (i, 0)),   # logits (orig dtype)
        ],
        out_specs=pl.BlockSpec((8, 128), lambda i: (i, 0)),      # per-step partial
        compiler_params=pltpu.CompilerParams(
            dimension_semantics=("parallel",),
            vmem_limit_bytes=40 * 1024 * 1024),
    )(targets2d, logits)

    return jnp.sum(partials)


def _reference_superloss(logits, targets, C, lam, batchsize):
    """Pure-numpy f64 reference (Lambert W via many Halley iterations)."""
    logits = np.asarray(logits, np.float64)
    targets = np.asarray(targets)
    tau = math.log(C)
    m = logits.max(-1, keepdims=True)
    lse = np.log(np.exp(logits - m).sum(-1)) + m[:, 0]
    l_i = lse - logits[np.arange(logits.shape[0]), targets]
    y = 0.5 * np.maximum(-2.0 / math.e, (l_i - tau) / lam)
    z = np.maximum(1.0 + math.e * y, 0.0)
    w = np.where(y < 0.0, -1.0 + np.sqrt(2.0 * z) - (2.0 / 3.0) * z,
                 np.log1p(np.maximum(y, 0.0)))
    for _ in range(100):
        ew = np.exp(w)
        f = w * ew - y
        wp1 = w + 1.0
        w = w - f * (2.0 * wp1) / (2.0 * ew * wp1 * wp1 - (w + 2.0) * f)
    sigma = np.exp(-w)
    loss = (l_i - tau) * sigma + lam * np.log(sigma) ** 2
    return loss.sum() / batchsize


if __name__ == "__main__":
    B, NUM_CLASSES = 8, 10  # C=10 default -> tau = log(10)
    key = jax.random.PRNGKey(0)
    k_logits, k_tgt = jax.random.split(key)
    logits = jax.random.normal(k_logits, (B, NUM_CLASSES), dtype=jnp.float32)
    targets = jax.random.randint(k_tgt, (B,), 0, NUM_CLASSES, dtype=jnp.int32)

    loss = superloss(logits, targets, C=10, lam=2.0, batchsize=B)
    loss = jax.block_until_ready(loss)
    assert jnp.isfinite(loss), f"non-finite loss: {loss}"

    ref = _reference_superloss(np.array(logits), np.array(targets), 10, 2.0, B)
    assert abs(float(loss) - ref) <= 1e-3 + 1e-3 * abs(ref), (float(loss), ref)
    print("KERNEL_OK")
</pallas_src>

<mosaic_0001>
module attributes {stable_mosaic.version = 11 : i64} {
  func.func @_superloss_kernel(%arg0: i32, %arg1: memref<128x1xi32, #tpu.memory_space<vmem>>, %arg2: memref<128x10xf32, #tpu.memory_space<vmem>>, %arg3: memref<8x128xf32, #tpu.memory_space<vmem>>) attributes {dimension_semantics = [#tpu.dimension_semantics<parallel>], iteration_bounds = array<i64: 1>, scalar_prefetch = 0 : i64, scratch_operands = 0 : i64, tpu.core_type = #tpu.core_type<tc>, window_params = [{transform_indices = @transform_0, window_bounds = array<i64: 128, 1>}, {transform_indices = @transform_1, window_bounds = array<i64: 128, 10>}, {transform_indices = @transform_2, window_bounds = array<i64: 8, 128>}]} {
    %c0 = arith.constant 0 : index
    %c0_0 = arith.constant 0 : index
    %0 = vector.load %arg2[%c0, %c0_0] : memref<128x10xf32, #tpu.memory_space<vmem>>, vector<128x10xf32>
    %c0_1 = arith.constant 0 : index
    %c0_2 = arith.constant 0 : index
    %1 = vector.load %arg1[%c0_1, %c0_2] : memref<128x1xi32, #tpu.memory_space<vmem>>, vector<128x1xi32>
    %cst = arith.constant dense<0xFF800000> : vector<128xf32>
    %2 = vector.multi_reduction <maximumf>, %0, %cst [1] : vector<128x10xf32> to vector<128xf32>
    %3 = vector.shape_cast %2 : vector<128xf32> to vector<128x1xf32>
    %4 = vector.broadcast %3 : vector<128x1xf32> to vector<128x10xf32>
    %5 = arith.subf %0, %4 : vector<128x10xf32>
    %6 = math.exp %5 : vector<128x10xf32>
    %cst_3 = arith.constant dense<0.000000e+00> : vector<128xf32>
    %7 = vector.multi_reduction <add>, %6, %cst_3 [1] : vector<128x10xf32> to vector<128xf32>
    %8 = vector.shape_cast %7 : vector<128xf32> to vector<128x1xf32>
    %9 = tpu.iota {dimensions = array<i32: 1>} : vector<128x10xi32>
    %10 = vector.broadcast %1 : vector<128x1xi32> to vector<128x10xi32>
    %11 = arith.cmpi eq, %9, %10 : vector<128x10xi32>
    %cst_4 = arith.constant 0.000000e+00 : f32
    %12 = vector.broadcast %cst_4 : f32 to vector<128x10xf32>
    %13 = arith.select %11, %5, %12 : vector<128x10xi1>, vector<128x10xf32>
    %cst_5 = arith.constant dense<0.000000e+00> : vector<128xf32>
    %14 = vector.multi_reduction <add>, %13, %cst_5 [1] : vector<128x10xf32> to vector<128xf32>
    %15 = vector.shape_cast %14 : vector<128xf32> to vector<128x1xf32>
    %16 = math.log %8 : vector<128x1xf32>
    %17 = arith.subf %16, %15 : vector<128x1xf32>
    %18 = vector.shape_cast %17 : vector<128x1xf32> to vector<1x128xf32>
    %cst_6 = arith.constant 2.30258512 : f32
    %19 = vector.broadcast %cst_6 : f32 to vector<1x128xf32>
    %20 = arith.subf %18, %19 : vector<1x128xf32>
    %cst_7 = arith.constant 5.000000e-01 : f32
    %21 = vector.broadcast %cst_7 : f32 to vector<1x128xf32>
    %22 = arith.mulf %20, %21 : vector<1x128xf32>
    %cst_8 = arith.constant -0.735758901 : f32
    %23 = vector.broadcast %cst_8 : f32 to vector<1x128xf32>
    %24 = arith.maximumf %22, %23 : vector<1x128xf32>
    %cst_9 = arith.constant 5.000000e-01 : f32
    %25 = vector.broadcast %cst_9 : f32 to vector<1x128xf32>
    %26 = arith.mulf %25, %24 : vector<1x128xf32>
    %cst_10 = arith.constant 2.71828175 : f32
    %27 = vector.broadcast %cst_10 : f32 to vector<1x128xf32>
    %28 = arith.mulf %27, %26 : vector<1x128xf32>
    %cst_11 = arith.constant 1.000000e+00 : f32
    %29 = vector.broadcast %cst_11 : f32 to vector<1x128xf32>
    %30 = arith.addf %29, %28 : vector<1x128xf32>
    %cst_12 = arith.constant 0.000000e+00 : f32
    %31 = vector.broadcast %cst_12 : f32 to vector<1x128xf32>
    %32 = arith.maximumf %30, %31 : vector<1x128xf32>
    %cst_13 = arith.constant 9.99999974E-6 : f32
    %33 = vector.broadcast %cst_13 : f32 to vector<1x128xf32>
    %34 = arith.cmpf olt, %32, %33 : vector<1x128xf32>
    %cst_14 = arith.constant 2.000000e+00 : f32
    %35 = vector.broadcast %cst_14 : f32 to vector<1x128xf32>
    %36 = arith.mulf %35, %32 : vector<1x128xf32>
    %37 = math.sqrt %36 : vector<1x128xf32>
    %cst_15 = arith.constant -1.000000e+00 : f32
    %38 = vector.broadcast %cst_15 : f32 to vector<1x128xf32>
    %39 = arith.addf %38, %37 : vector<1x128xf32>
    %cst_16 = arith.constant 0.666666686 : f32
    %40 = vector.broadcast %cst_16 : f32 to vector<1x128xf32>
    %41 = arith.mulf %40, %32 : vector<1x128xf32>
    %42 = arith.subf %39, %41 : vector<1x128xf32>
    %cst_17 = arith.constant 0.000000e+00 : f32
    %43 = vector.broadcast %cst_17 : f32 to vector<1x128xf32>
    %44 = arith.cmpf olt, %26, %43 : vector<1x128xf32>
    %cst_18 = arith.constant 0.000000e+00 : f32
    %45 = vector.broadcast %cst_18 : f32 to vector<1x128xf32>
    %46 = arith.maximumf %26, %45 : vector<1x128xf32>
    %47 = math.log1p %46 : vector<1x128xf32>
    %48 = arith.select %44, %42, %47 : vector<1x128xi1>, vector<1x128xf32>
    %49 = math.exp %48 : vector<1x128xf32>
    %50 = arith.mulf %48, %49 : vector<1x128xf32>
    %51 = arith.subf %50, %26 : vector<1x128xf32>
    %cst_19 = arith.constant 1.000000e+00 : f32
    %52 = vector.broadcast %cst_19 : f32 to vector<1x128xf32>
    %53 = arith.addf %48, %52 : vector<1x128xf32>
    %cst_20 = arith.constant 2.000000e+00 : f32
    %54 = vector.broadcast %cst_20 : f32 to vector<1x128xf32>
    %55 = arith.mulf %54, %53 : vector<1x128xf32>
    %56 = arith.mulf %51, %55 : vector<1x128xf32>
    %cst_21 = arith.constant 2.000000e+00 : f32
    %57 = vector.broadcast %cst_21 : f32 to vector<1x128xf32>
    %58 = arith.mulf %57, %49 : vector<1x128xf32>
    %59 = arith.mulf %58, %53 : vector<1x128xf32>
    %60 = arith.mulf %59, %53 : vector<1x128xf32>
    %cst_22 = arith.constant 2.000000e+00 : f32
    %61 = vector.broadcast %cst_22 : f32 to vector<1x128xf32>
    %62 = arith.addf %48, %61 : vector<1x128xf32>
    %63 = arith.mulf %62, %51 : vector<1x128xf32>
    %64 = arith.subf %60, %63 : vector<1x128xf32>
    %65 = math.absf %64 : vector<1x128xf32>
    %cst_23 = arith.constant 1.000000e-30 : f32
    %66 = vector.broadcast %cst_23 : f32 to vector<1x128xf32>
    %67 = arith.cmpf olt, %65, %66 : vector<1x128xf32>
    %cst_24 = arith.constant 0.000000e+00 : f32
    %68 = vector.broadcast %cst_24 : f32 to vector<1x128xf32>
    %69 = arith.cmpf olt, %64, %68 : vector<1x128xf32>
    %cst_25 = arith.constant -1.000000e-30 : f32
    %cst_26 = arith.constant 1.000000e-30 : f32
    %70 = vector.broadcast %cst_25 : f32 to vector<1x128xf32>
    %71 = vector.broadcast %cst_26 : f32 to vector<1x128xf32>
    %72 = arith.select %69, %70, %71 : vector<1x128xi1>, vector<1x128xf32>
    %73 = arith.select %67, %72, %64 : vector<1x128xi1>, vector<1x128xf32>
    %74 = tpu.reciprocal %73 {approx = true} : vector<1x128xf32> -> vector<1x128xf32>
    %75 = arith.mulf %56, %74 : vector<1x128xf32>
    %76 = arith.subf %48, %75 : vector<1x128xf32>
    %77 = arith.select %34, %48, %76 : vector<1x128xi1>, vector<1x128xf32>
    %78 = math.exp %77 : vector<1x128xf32>
    %79 = arith.mulf %77, %78 : vector<1x128xf32>
    %80 = arith.subf %79, %26 : vector<1x128xf32>
    %cst_27 = arith.constant 1.000000e+00 : f32
    %81 = vector.broadcast %cst_27 : f32 to vector<1x128xf32>
    %82 = arith.addf %77, %81 : vector<1x128xf32>
    %cst_28 = arith.constant 2.000000e+00 : f32
    %83 = vector.broadcast %cst_28 : f32 to vector<1x128xf32>
    %84 = arith.mulf %83, %82 : vector<1x128xf32>
    %85 = arith.mulf %80, %84 : vector<1x128xf32>
    %cst_29 = arith.constant 2.000000e+00 : f32
    %86 = vector.broadcast %cst_29 : f32 to vector<1x128xf32>
    %87 = arith.mulf %86, %78 : vector<1x128xf32>
    %88 = arith.mulf %87, %82 : vector<1x128xf32>
    %89 = arith.mulf %88, %82 : vector<1x128xf32>
    %cst_30 = arith.constant 2.000000e+00 : f32
    %90 = vector.broadcast %cst_30 : f32 to vector<1x128xf32>
    %91 = arith.addf %77, %90 : vector<1x128xf32>
    %92 = arith.mulf %91, %80 : vector<1x128xf32>
    %93 = arith.subf %89, %92 : vector<1x128xf32>
    %94 = math.absf %93 : vector<1x128xf32>
    %cst_31 = arith.constant 1.000000e-30 : f32
    %95 = vector.broadcast %cst_31 : f32 to vector<1x128xf32>
    %96 = arith.cmpf olt, %94, %95 : vector<1x128xf32>
    %cst_32 = arith.constant 0.000000e+00 : f32
    %97 = vector.broadcast %cst_32 : f32 to vector<1x128xf32>
    %98 = arith.cmpf olt, %93, %97 : vector<1x128xf32>
    %cst_33 = arith.constant -1.000000e-30 : f32
    %cst_34 = arith.constant 1.000000e-30 : f32
    %99 = vector.broadcast %cst_33 : f32 to vector<1x128xf32>
    %100 = vector.broadcast %cst_34 : f32 to vector<1x128xf32>
    %101 = arith.select %98, %99, %100 : vector<1x128xi1>, vector<1x128xf32>
    %102 = arith.select %96, %101, %93 : vector<1x128xi1>, vector<1x128xf32>
    %103 = tpu.reciprocal %102 {approx = true} : vector<1x128xf32> -> vector<1x128xf32>
    %104 = arith.mulf %85, %103 : vector<1x128xf32>
    %105 = arith.subf %77, %104 : vector<1x128xf32>
    %106 = arith.select %34, %77, %105 : vector<1x128xi1>, vector<1x128xf32>
    %107 = math.exp %106 : vector<1x128xf32>
    %108 = arith.mulf %106, %107 : vector<1x128xf32>
    %109 = arith.subf %108, %26 : vector<1x128xf32>
    %cst_35 = arith.constant 1.000000e+00 : f32
    %110 = vector.broadcast %cst_35 : f32 to vector<1x128xf32>
    %111 = arith.addf %106, %110 : vector<1x128xf32>
    %cst_36 = arith.constant 2.000000e+00 : f32
    %112 = vector.broadcast %cst_36 : f32 to vector<1x128xf32>
    %113 = arith.mulf %112, %111 : vector<1x128xf32>
    %114 = arith.mulf %109, %113 : vector<1x128xf32>
    %cst_37 = arith.constant 2.000000e+00 : f32
    %115 = vector.broadcast %cst_37 : f32 to vector<1x128xf32>
    %116 = arith.mulf %115, %107 : vector<1x128xf32>
    %117 = arith.mulf %116, %111 : vector<1x128xf32>
    %118 = arith.mulf %117, %111 : vector<1x128xf32>
    %cst_38 = arith.constant 2.000000e+00 : f32
    %119 = vector.broadcast %cst_38 : f32 to vector<1x128xf32>
    %120 = arith.addf %106, %119 : vector<1x128xf32>
    %121 = arith.mulf %120, %109 : vector<1x128xf32>
    %122 = arith.subf %118, %121 : vector<1x128xf32>
    %123 = math.absf %122 : vector<1x128xf32>
    %cst_39 = arith.constant 1.000000e-30 : f32
    %124 = vector.broadcast %cst_39 : f32 to vector<1x128xf32>
    %125 = arith.cmpf olt, %123, %124 : vector<1x128xf32>
    %cst_40 = arith.constant 0.000000e+00 : f32
    %126 = vector.broadcast %cst_40 : f32 to vector<1x128xf32>
    %127 = arith.cmpf olt, %122, %126 : vector<1x128xf32>
    %cst_41 = arith.constant -1.000000e-30 : f32
    %cst_42 = arith.constant 1.000000e-30 : f32
    %128 = vector.broadcast %cst_41 : f32 to vector<1x128xf32>
    %129 = vector.broadcast %cst_42 : f32 to vector<1x128xf32>
    %130 = arith.select %127, %128, %129 : vector<1x128xi1>, vector<1x128xf32>
    %131 = arith.select %125, %130, %122 : vector<1x128xi1>, vector<1x128xf32>
    %132 = tpu.reciprocal %131 {approx = true} : vector<1x128xf32> -> vector<1x128xf32>
    %133 = arith.mulf %114, %132 : vector<1x128xf32>
    %134 = arith.subf %106, %133 : vector<1x128xf32>
    %135 = arith.select %34, %106, %134 : vector<1x128xi1>, vector<1x128xf32>
    %136 = math.exp %135 : vector<1x128xf32>
    %137 = arith.mulf %135, %136 : vector<1x128xf32>
    %138 = arith.subf %137, %26 : vector<1x128xf32>
    %cst_43 = arith.constant 1.000000e+00 : f32
    %139 = vector.broadcast %cst_43 : f32 to vector<1x128xf32>
    %140 = arith.addf %135, %139 : vector<1x128xf32>
    %cst_44 = arith.constant 2.000000e+00 : f32
    %141 = vector.broadcast %cst_44 : f32 to vector<1x128xf32>
    %142 = arith.mulf %141, %140 : vector<1x128xf32>
    %143 = arith.mulf %138, %142 : vector<1x128xf32>
    %cst_45 = arith.constant 2.000000e+00 : f32
    %144 = vector.broadcast %cst_45 : f32 to vector<1x128xf32>
    %145 = arith.mulf %144, %136 : vector<1x128xf32>
    %146 = arith.mulf %145, %140 : vector<1x128xf32>
    %147 = arith.mulf %146, %140 : vector<1x128xf32>
    %cst_46 = arith.constant 2.000000e+00 : f32
    %148 = vector.broadcast %cst_46 : f32 to vector<1x128xf32>
    %149 = arith.addf %135, %148 : vector<1x128xf32>
    %150 = arith.mulf %149, %138 : vector<1x128xf32>
    %151 = arith.subf %147, %150 : vector<1x128xf32>
    %152 = math.absf %151 : vector<1x128xf32>
    %cst_47 = arith.constant 1.000000e-30 : f32
    %153 = vector.broadcast %cst_47 : f32 to vector<1x128xf32>
    %154 = arith.cmpf olt, %152, %153 : vector<1x128xf32>
    %cst_48 = arith.constant 0.000000e+00 : f32
    %155 = vector.broadcast %cst_48 : f32 to vector<1x128xf32>
    %156 = arith.cmpf olt, %151, %155 : vector<1x128xf32>
    %cst_49 = arith.constant -1.000000e-30 : f32
    %cst_50 = arith.constant 1.000000e-30 : f32
    %157 = vector.broadcast %cst_49 : f32 to vector<1x128xf32>
    %158 = vector.broadcast %cst_50 : f32 to vector<1x128xf32>
    %159 = arith.select %156, %157, %158 : vector<1x128xi1>, vector<1x128xf32>
    %160 = arith.select %154, %159, %151 : vector<1x128xi1>, vector<1x128xf32>
    %161 = arith.divf %143, %160 : vector<1x128xf32>
    %162 = arith.subf %135, %161 : vector<1x128xf32>
    %163 = arith.select %34, %135, %162 : vector<1x128xi1>, vector<1x128xf32>
    %cst_51 = arith.constant 0.000000e+00 : f32
    %164 = vector.broadcast %cst_51 : f32 to vector<1x128xf32>
    %165 = arith.subf %164, %163 : vector<1x128xf32>
    %166 = math.exp %165 : vector<1x128xf32>
    %cst_52 = arith.constant 2.30258512 : f32
    %167 = vector.broadcast %cst_52 : f32 to vector<1x128xf32>
    %168 = arith.subf %18, %167 : vector<1x128xf32>
    %169 = arith.mulf %168, %166 : vector<1x128xf32>
    %170 = arith.mulf %163, %163 : vector<1x128xf32>
    %cst_53 = arith.constant 2.000000e+00 : f32
    %171 = vector.broadcast %cst_53 : f32 to vector<1x128xf32>
    %172 = arith.mulf %171, %170 : vector<1x128xf32>
    %173 = arith.addf %169, %172 : vector<1x128xf32>
    %174 = tpu.iota {dimensions = array<i32: 0>} : vector<1x128xi32>
    %175 = tpu.iota {dimensions = array<i32: 1>} : vector<1x128xi32>
    %c128_i32 = arith.constant 128 : i32
    %176 = arith.muli %arg0, %c128_i32 : i32
    %c128_i32_54 = arith.constant 128 : i32
    %177 = vector.broadcast %c128_i32_54 : i32 to vector<1x128xi32>
    %178 = arith.muli %174, %177 : vector<1x128xi32>
    %179 = vector.broadcast %176 : i32 to vector<1x128xi32>
    %180 = arith.addi %179, %178 : vector<1x128xi32>
    %181 = arith.addi %180, %175 : vector<1x128xi32>
    %c8_i32 = arith.constant 8 : i32
    %182 = vector.broadcast %c8_i32 : i32 to vector<1x128xi32>
    %183 = arith.cmpi slt, %181, %182 : vector<1x128xi32>
    %cst_55 = arith.constant 0.000000e+00 : f32
    %184 = vector.broadcast %cst_55 : f32 to vector<1x128xf32>
    %185 = arith.select %183, %173, %184 : vector<1x128xi1>, vector<1x128xf32>
    %cst_56 = arith.constant dense<0.000000e+00> : vector<128xf32>
    %186 = vector.multi_reduction <add>, %185, %cst_56 [0] : vector<1x128xf32> to vector<128xf32>
    %187 = vector.shape_cast %186 : vector<128xf32> to vector<1x128xf32>
    %cst_57 = arith.constant 1.250000e-01 : f32
    %188 = vector.broadcast %cst_57 : f32 to vector<1x128xf32>
    %189 = arith.mulf %187, %188 : vector<1x128xf32>
    %190 = tpu.iota {dimensions = array<i32: 0>} : vector<8x128xi32>
    %c0_i32 = arith.constant 0 : i32
    %191 = vector.broadcast %c0_i32 : i32 to vector<8x128xi32>
    %192 = arith.cmpi eq, %190, %191 : vector<8x128xi32>
    %193 = vector.shape_cast %189 : vector<1x128xf32> to vector<1x128xf32>
    %194 = vector.broadcast %193 : vector<1x128xf32> to vector<8x128xf32>
    %cst_58 = arith.constant 0.000000e+00 : f32
    %195 = vector.broadcast %cst_58 : f32 to vector<8x128xf32>
    %196 = arith.select %192, %194, %195 : vector<8x128xi1>, vector<8x128xf32>
    %c0_59 = arith.constant 0 : index
    %c0_60 = arith.constant 0 : index
    %197 = vector.load %arg3[%c0_59, %c0_60] : memref<8x128xf32, #tpu.memory_space<vmem>>, vector<8x128xf32>
    tpu.vector_store %arg3[%c0_59, %c0_60], %196 {strides = array<i32>} : memref<8x128xf32, #tpu.memory_space<vmem>>, vector<8x128xf32>,
    return
  }
  func.func @transform_0(%arg0: i32) -> (i32, i32) {
    %c0_i32 = arith.constant 0 : i32
    %c0_i32_0 = arith.constant 0 : i32
    return %arg0, %c0_i32 : i32, i32
  }
  func.func @transform_1(%arg0: i32) -> (i32, i32) {
    %c0_i32 = arith.constant 0 : i32
    %c0_i32_0 = arith.constant 0 : i32
    return %arg0, %c0_i32 : i32, i32
  }
  func.func @transform_2(%arg0: i32) -> (i32, i32) {
    %c0_i32 = arith.constant 0 : i32
    %c0_i32_0 = arith.constant 0 : i32
    return %arg0, %c0_i32 : i32, i32
  }
}

</mosaic_0001>

<llo_original>
// kernel: tpu_custom_call.1
$region0: #{tpu_custom_call.1}
  #allocation0 [shape = 'u32[]', space=smem, size = 0x4, offset = 0x4, fixed_abs, tag = 'smem constant byte address 0x4 - core index']
  #allocation1 [shape = 'u32[144,128]{1,0:T(1,128)}', space=vmem, size = 0x12000, scoped, tag = 'internal scratch']
  %s0 = inlined_call_operand.vmem [shape: s32[128,1], index: 0, kind: input, shape index: {}]
  %s1 = inlined_call_operand.vmem [shape: f32[128,10], index: 1, kind: input, shape index: {}]
  %s2 = inlined_call_operand.hbm [shape: f32[8,128], index: 2, kind: output, shape index: {}]
  %s3 = sld [smem:[#allocation0]]
  $region18: #{tpu_custom_call.1} parent=0
    _
  %s5 = ssub.s32 1, %s3
  %s6 = scalar_select 0, %s5, %s3
  $region1: #{tpu_custom_call.1} parent=0
    #allocation2 [shape = 'u8[4096]{0}', space=vmem, size = 0x1000, scoped, tag = 'output window, operand 0, single buffered']
    #allocation3 [shape = 's32[1]{0}', space=sflag, size = 0x4, scoped, tag = 'scoped memory for tpu_custom_call.1']
    %7 = vsyncpa [#allocation3], 0
    // Predicated region
    $region2: #{tpu_custom_call.1} parent=1 // pred_check
      _
    $region3: #{tpu_custom_call.1} parent=1 // pred_check_branch
      %9 = sbr.rel (0) target = $region5
    $region4: #{tpu_custom_call.1} parent=1 // pred_region
      _
    $region5: #{tpu_custom_call.1} parent=1 // pred_fallthru
      _
    // Predicated region
    $region6: #{tpu_custom_call.1} parent=1 // pred_check
      _
    $region7: #{tpu_custom_call.1} parent=1 // pred_check_branch
      %11 = sbr.rel (0) target = $region9
    $region8: #{tpu_custom_call.1} parent=1 // pred_region
      _
    $region9: #{tpu_custom_call.1} parent=1 // pred_fallthru
      _
    %v12 = vld [vmem:[%s1] sm:$0xff]
    %v13 = vld [vmem:[%s1 + $0x8] sm:$0xff]
    %v14 = vld [vmem:[%s1 + $0x10] sm:$0xff]
    %v15 = vld [vmem:[%s1 + $0x18] sm:$0xff]
    %v16 = vld [vmem:[%s1 + $0x20] sm:$0xff]
    %v17 = vld [vmem:[%s1 + $0x28] sm:$0xff]
    %v18 = vld [vmem:[%s1 + $0x30] sm:$0xff]
    %v19 = vld [vmem:[%s1 + $0x38] sm:$0xff]
    %v20 = vld [vmem:[%s1 + $0x40] sm:$0xff]
    %v21 = vld [vmem:[%s1 + $0x48] sm:$0xff]
    %v22 = vld [vmem:[%s1 + $0x50] sm:$0xff]
    %v23 = vld [vmem:[%s1 + $0x58] sm:$0xff]
    %v24 = vld [vmem:[%s1 + $0x60] sm:$0xff]
    %v25 = vld [vmem:[%s1 + $0x68] sm:$0xff]
    %v26 = vld [vmem:[%s1 + $0x70] sm:$0xff]
    %v27 = vld [vmem:[%s1 + $0x78] sm:$0xff]
    %v28 = vld [vmem:[%s0] sm:$0xff]
    %v29 = vld [vmem:[%s0 + $0x8] sm:$0xff]
    %v30 = vld [vmem:[%s0 + $0x10] sm:$0xff]
    %v31 = vld [vmem:[%s0 + $0x18] sm:$0xff]
    %v32 = vld [vmem:[%s0 + $0x20] sm:$0xff]
    %v33 = vld [vmem:[%s0 + $0x28] sm:$0xff]
    %v34 = vld [vmem:[%s0 + $0x30] sm:$0xff]
    %v35 = vld [vmem:[%s0 + $0x38] sm:$0xff]
    %v36 = vld [vmem:[%s0 + $0x40] sm:$0xff]
    %v37 = vld [vmem:[%s0 + $0x48] sm:$0xff]
    %v38 = vld [vmem:[%s0 + $0x50] sm:$0xff]
    %v39 = vld [vmem:[%s0 + $0x58] sm:$0xff]
    %v40 = vld [vmem:[%s0 + $0x60] sm:$0xff]
    %v41 = vld [vmem:[%s0 + $0x68] sm:$0xff]
    %v42 = vld [vmem:[%s0 + $0x70] sm:$0xff]
    %v43 = vld [vmem:[%s0 + $0x78] sm:$0xff]
    %vm44 = vcmask 80896
    %v45 = vsel %vm44, %v12, -inf
    %46 = vmax.xlane.f32.xlu0 %v45
    %v47 = vpop.xlane.xlu0 %46
    %v48 = vsel %vm44, %v13, -inf
    %49 = vmax.xlane.f32.xlu0 %v48
    %v50 = vpop.xlane.xlu0 %49
    %v51 = vsel %vm44, %v14, -inf
    %52 = vmax.xlane.f32.xlu0 %v51
    %v53 = vpop.xlane.xlu0 %52
    %v54 = vsel %vm44, %v15, -inf
    %55 = vmax.xlane.f32.xlu0 %v54
    %v56 = vpop.xlane.xlu0 %55
    %v57 = vsel %vm44, %v16, -inf
    %58 = vmax.xlane.f32.xlu0 %v57
    %v59 = vpop.xlane.xlu0 %58
    %v60 = vsel %vm44, %v17, -inf
    %61 = vmax.xlane.f32.xlu0 %v60
    %v62 = vpop.xlane.xlu0 %61
    %v63 = vsel %vm44, %v18, -inf
    %64 = vmax.xlane.f32.xlu0 %v63
    %v65 = vpop.xlane.xlu0 %64
    %v66 = vsel %vm44, %v19, -inf
    %67 = vmax.xlane.f32.xlu0 %v66
    %v68 = vpop.xlane.xlu0 %67
    %v69 = vsel %vm44, %v20, -inf
    %70 = vmax.xlane.f32.xlu0 %v69
    %v71 = vpop.xlane.xlu0 %70
    %v72 = vsel %vm44, %v21, -inf
    %73 = vmax.xlane.f32.xlu0 %v72
    %v74 = vpop.xlane.xlu0 %73
    %v75 = vsel %vm44, %v22, -inf
    %76 = vmax.xlane.f32.xlu0 %v75
    %v77 = vpop.xlane.xlu0 %76
    %v78 = vsel %vm44, %v23, -inf
    %79 = vmax.xlane.f32.xlu0 %v78
    %v80 = vpop.xlane.xlu0 %79
    %v81 = vsel %vm44, %v24, -inf
    %82 = vmax.xlane.f32.xlu0 %v81
    %v83 = vpop.xlane.xlu0 %82
    %v84 = vsel %vm44, %v25, -inf
    %85 = vmax.xlane.f32.xlu0 %v84
    %v86 = vpop.xlane.xlu0 %85
    %v87 = vsel %vm44, %v26, -inf
    %88 = vmax.xlane.f32.xlu0 %v87
    %v89 = vpop.xlane.xlu0 %88
    %v90 = vsel %vm44, %v27, -inf
    %91 = vmax.xlane.f32.xlu0 %v90
    %v92 = vpop.xlane.xlu0 %91
    %v93 = vsub.f32 %v12, %v47
    %v94 = vsub.f32 %v13, %v50
    %v95 = vsub.f32 %v14, %v53
    %v96 = vsub.f32 %v15, %v56
    %v97 = vsub.f32 %v16, %v59
    %v98 = vsub.f32 %v17, %v62
    %v99 = vsub.f32 %v18, %v65
    %v100 = vsub.f32 %v19, %v68
    %v101 = vsub.f32 %v20, %v71
    %v102 = vsub.f32 %v21, %v74
    %v103 = vsub.f32 %v22, %v77
    %v104 = vsub.f32 %v23, %v80
    %v105 = vsub.f32 %v24, %v83
    %v106 = vsub.f32 %v25, %v86
    %v107 = vsub.f32 %v26, %v89
    %v108 = vsub.f32 %v27, %v92
    %v109 = vmul.f32 %v93, 1.442695
    %v110 = vpow.pop %v109
    %v111 = vmul.f32 %v94, 1.442695
    %v112 = vpow.pop %v111
    %v113 = vmul.f32 %v95, 1.442695
    %v114 = vpow.pop %v113
    %v115 = vmul.f32 %v96, 1.442695
    %v116 = vpow.pop %v115
    %v117 = vmul.f32 %v97, 1.442695
    %v118 = vpow.pop %v117
    %v119 = vmul.f32 %v98, 1.442695
    %v120 = vpow.pop %v119
    %v121 = vmul.f32 %v99, 1.442695
    %v122 = vpow.pop %v121
    %v123 = vmul.f32 %v100, 1.442695
    %v124 = vpow.pop %v123
    %v125 = vmul.f32 %v101, 1.442695
    %v126 = vpow.pop %v125
    %v127 = vmul.f32 %v102, 1.442695
    %v128 = vpow.pop %v127
    %v129 = vmul.f32 %v103, 1.442695
    %v130 = vpow.pop %v129
    %v131 = vmul.f32 %v104, 1.442695
    %v132 = vpow.pop %v131
    %v133 = vmul.f32 %v105, 1.442695
    %v134 = vpow.pop %v133
    %v135 = vmul.f32 %v106, 1.442695
    %v136 = vpow.pop %v135
    %v137 = vmul.f32 %v107, 1.442695
    %v138 = vpow.pop %v137
    %v139 = vmul.f32 %v108, 1.442695
    %v140 = vpow.pop %v139
    %v141 = vsel %vm44, %v110, 0.0
    %142 = vadd.xlane.f32.xlu0 %v141
    %v143 = vpop.xlane.xlu0 %142
    %v144 = vsel %vm44, %v112, 0.0
    %145 = vadd.xlane.f32.xlu0 %v144
    %v146 = vpop.xlane.xlu0 %145
    %v147 = vsel %vm44, %v114, 0.0
    %148 = vadd.xlane.f32.xlu0 %v147
    %v149 = vpop.xlane.xlu0 %148
    %v150 = vsel %vm44, %v116, 0.0
    %151 = vadd.xlane.f32.xlu0 %v150
    %v152 = vpop.xlane.xlu0 %151
    %v153 = vsel %vm44, %v118, 0.0
    %154 = vadd.xlane.f32.xlu0 %v153
    %v155 = vpop.xlane.xlu0 %154
    %v156 = vsel %vm44, %v120, 0.0
    %157 = vadd.xlane.f32.xlu0 %v156
    %v158 = vpop.xlane.xlu0 %157
    %v159 = vsel %vm44, %v122, 0.0
    %160 = vadd.xlane.f32.xlu0 %v159
    %v161 = vpop.xlane.xlu0 %160
    %v162 = vsel %vm44, %v124, 0.0
    %163 = vadd.xlane.f32.xlu0 %v162
    %v164 = vpop.xlane.xlu0 %163
    %v165 = vsel %vm44, %v126, 0.0
    %166 = vadd.xlane.f32.xlu0 %v165
    %v167 = vpop.xlane.xlu0 %166
    %v168 = vsel %vm44, %v128, 0.0
    %169 = vadd.xlane.f32.xlu0 %v168
    %v170 = vpop.xlane.xlu0 %169
    %v171 = vsel %vm44, %v130, 0.0
    %172 = vadd.xlane.f32.xlu0 %v171
    %v173 = vpop.xlane.xlu0 %172
    %v174 = vsel %vm44, %v132, 0.0
    %175 = vadd.xlane.f32.xlu0 %v174
    %v176 = vpop.xlane.xlu0 %175
    %v177 = vsel %vm44, %v134, 0.0
    %178 = vadd.xlane.f32.xlu0 %v177
    %v179 = vpop.xlane.xlu0 %178
    %v180 = vsel %vm44, %v136, 0.0
    %181 = vadd.xlane.f32.xlu0 %v180
    %v182 = vpop.xlane.xlu0 %181
    %v183 = vsel %vm44, %v138, 0.0
    %184 = vadd.xlane.f32.xlu0 %v183
    %v185 = vpop.xlane.xlu0 %184
    %v186 = vsel %vm44, %v140, 0.0
    %187 = vadd.xlane.f32.xlu0 %v186
    %v188 = vpop.xlane.xlu0 %187
    %v189 = vlaneseq
    %v190 = vand.u32 %v189, 127
    %191 = vset.pattern.permute.xlu0 0
    %192 = vperm.xlu0 %191, %v28
    %v193 = vpop.permute.xlu0 %192
    %194 = vset.pattern.permute.xlu0 0
    %195 = vperm.xlu0 %194, %v29
    %v196 = vpop.permute.xlu0 %195
    %197 = vset.pattern.permute.xlu0 0
    %198 = vperm.xlu0 %197, %v30
    %v199 = vpop.permute.xlu0 %198
    %200 = vset.pattern.permute.xlu0 0
    %201 = vperm.xlu0 %200, %v31
    %v202 = vpop.permute.xlu0 %201
    %203 = vset.pattern.permute.xlu0 0
    %204 = vperm.xlu0 %203, %v32
    %v205 = vpop.permute.xlu0 %204
    %206 = vset.pattern.permute.xlu0 0
    %207 = vperm.xlu0 %206, %v33
    %v208 = vpop.permute.xlu0 %207
    %209 = vset.pattern.permute.xlu0 0
    %210 = vperm.xlu0 %209, %v34
    %v211 = vpop.permute.xlu0 %210
    %212 = vset.pattern.permute.xlu0 0
    %213 = vperm.xlu0 %212, %v35
    %v214 = vpop.permute.xlu0 %213
    %215 = vset.pattern.permute.xlu0 0
    %216 = vperm.xlu0 %215, %v36
    %v217 = vpop.permute.xlu0 %216
    %218 = vset.pattern.permute.xlu0 0
    %219 = vperm.xlu0 %218, %v37
    %v220 = vpop.permute.xlu0 %219
    %221 = vset.pattern.permute.xlu0 0
    %222 = vperm.xlu0 %221, %v38
    %v223 = vpop.permute.xlu0 %222
    %224 = vset.pattern.permute.xlu0 0
    %225 = vperm.xlu0 %224, %v39
    %v226 = vpop.permute.xlu0 %225
    %227 = vset.pattern.permute.xlu0 0
    %228 = vperm.xlu0 %227, %v40
    %v229 = vpop.permute.xlu0 %228
    %230 = vset.pattern.permute.xlu0 0
    %231 = vperm.xlu0 %230, %v41
    %v232 = vpop.permute.xlu0 %231
    %233 = vset.pattern.permute.xlu0 0
    %234 = vperm.xlu0 %233, %v42
    %v235 = vpop.permute.xlu0 %234
    %236 = vset.pattern.permute.xlu0 0
    %237 = vperm.xlu0 %236, %v43
    %v238 = vpop.permute.xlu0 %237
    %vm239 = vcmp.eq.s32.totalorder %v190, %v193
    %vm240 = vcmp.eq.s32.totalorder %v190, %v196
    %vm241 = vcmp.eq.s32.totalorder %v190, %v199
    %vm242 = vcmp.eq.s32.totalorder %v190, %v202
    %vm243 = vcmp.eq.s32.totalorder %v190, %v205
    %vm244 = vcmp.eq.s32.totalorder %v190, %v208
    %vm245 = vcmp.eq.s32.totalorder %v190, %v211
    %vm246 = vcmp.eq.s32.totalorder %v190, %v214
    %vm247 = vcmp.eq.s32.totalorder %v190, %v217
    %vm248 = vcmp.eq.s32.totalorder %v190, %v220
    %vm249 = vcmp.eq.s32.totalorder %v190, %v223
    %vm250 = vcmp.eq.s32.totalorder %v190, %v226
    %vm251 = vcmp.eq.s32.totalorder %v190, %v229
    %vm252 = vcmp.eq.s32.totalorder %v190, %v232
    %vm253 = vcmp.eq.s32.totalorder %v190, %v235
    %vm254 = vcmp.eq.s32.totalorder %v190, %v238
    %v255 = vsel %vm239, %v93, 0.0
    %v256 = vsel %vm240, %v94, 0.0
    %v257 = vsel %vm241, %v95, 0.0
    %v258 = vsel %vm242, %v96, 0.0
    %v259 = vsel %vm243, %v97, 0.0
    %v260 = vsel %vm244, %v98, 0.0
    %v261 = vsel %vm245, %v99, 0.0
    %v262 = vsel %vm246, %v100, 0.0
    %v263 = vsel %vm247, %v101, 0.0
    %v264 = vsel %vm248, %v102, 0.0
    %v265 = vsel %vm249, %v103, 0.0
    %v266 = vsel %vm250, %v104, 0.0
    %v267 = vsel %vm251, %v105, 0.0
    %v268 = vsel %vm252, %v106, 0.0
    %v269 = vsel %vm253, %v107, 0.0
    %v270 = vsel %vm254, %v108, 0.0
    %v271 = vsel %vm44, %v255, 0.0
    %272 = vadd.xlane.f32.xlu0 %v271
    %v273 = vpop.xlane.xlu0 %272
    %v274 = vsel %vm44, %v256, 0.0
    %275 = vadd.xlane.f32.xlu0 %v274
    %v276 = vpop.xlane.xlu0 %275
    %v277 = vsel %vm44, %v257, 0.0
    %278 = vadd.xlane.f32.xlu0 %v277
    %v279 = vpop.xlane.xlu0 %278
    %v280 = vsel %vm44, %v258, 0.0
    %281 = vadd.xlane.f32.xlu0 %v280
    %v282 = vpop.xlane.xlu0 %281
    %v283 = vsel %vm44, %v259, 0.0
    %284 = vadd.xlane.f32.xlu0 %v283
    %v285 = vpop.xlane.xlu0 %284
    %v286 = vsel %vm44, %v260, 0.0
    %287 = vadd.xlane.f32.xlu0 %v286
    %v288 = vpop.xlane.xlu0 %287
    %v289 = vsel %vm44, %v261, 0.0
    %290 = vadd.xlane.f32.xlu0 %v289
    %v291 = vpop.xlane.xlu0 %290
    %v292 = vsel %vm44, %v262, 0.0
    %293 = vadd.xlane.f32.xlu0 %v292
    %v294 = vpop.xlane.xlu0 %293
    %v295 = vsel %vm44, %v263, 0.0
    %296 = vadd.xlane.f32.xlu0 %v295
    %v297 = vpop.xlane.xlu0 %296
    %v298 = vsel %vm44, %v264, 0.0
    %299 = vadd.xlane.f32.xlu0 %v298
    %v300 = vpop.xlane.xlu0 %299
    %v301 = vsel %vm44, %v265, 0.0
    %302 = vadd.xlane.f32.xlu0 %v301
    %v303 = vpop.xlane.xlu0 %302
    %v304 = vsel %vm44, %v266, 0.0
    %305 = vadd.xlane.f32.xlu0 %v304
    %v306 = vpop.xlane.xlu0 %305
    %v307 = vsel %vm44, %v267, 0.0
    %308 = vadd.xlane.f32.xlu0 %v307
    %v309 = vpop.xlane.xlu0 %308
    %v310 = vsel %vm44, %v268, 0.0
    %311 = vadd.xlane.f32.xlu0 %v310
    %v312 = vpop.xlane.xlu0 %311
    %v313 = vsel %vm44, %v269, 0.0
    %314 = vadd.xlane.f32.xlu0 %v313
    %v315 = vpop.xlane.xlu0 %314
    %v316 = vsel %vm44, %v270, 0.0
    %317 = vadd.xlane.f32.xlu0 %v316
    %v318 = vpop.xlane.xlu0 %317
    %v319 = vlog2.pop %v143
    %v320 = vmul.f32 %v319, 0.6931472
    %v321 = vlog2.pop %v146
    %v322 = vmul.f32 %v321, 0.6931472
    %v323 = vlog2.pop %v149
    %v324 = vmul.f32 %v323, 0.6931472
    %v325 = vlog2.pop %v152
    %v326 = vmul.f32 %v325, 0.6931472
    %v327 = vlog2.pop %v155
    %v328 = vmul.f32 %v327, 0.6931472
    %v329 = vlog2.pop %v158
    %v330 = vmul.f32 %v329, 0.6931472
    %v331 = vlog2.pop %v161
    %v332 = vmul.f32 %v331, 0.6931472
    %v333 = vlog2.pop %v164
    %v334 = vmul.f32 %v333, 0.6931472
    %v335 = vlog2.pop %v167
    %v336 = vmul.f32 %v335, 0.6931472
    %v337 = vlog2.pop %v170
    %v338 = vmul.f32 %v337, 0.6931472
    %v339 = vlog2.pop %v173
    %v340 = vmul.f32 %v339, 0.6931472
    %v341 = vlog2.pop %v176
    %v342 = vmul.f32 %v341, 0.6931472
    %v343 = vlog2.pop %v179
    %v344 = vmul.f32 %v343, 0.6931472
    %v345 = vlog2.pop %v182
    %v346 = vmul.f32 %v345, 0.6931472
    %v347 = vlog2.pop %v185
    %v348 = vmul.f32 %v347, 0.6931472
    %v349 = vlog2.pop %v188
    %v350 = vmul.f32 %v349, 0.6931472
    %v351 = vsub.f32 %v320, %v273
    %v352 = vsub.f32 %v322, %v276
    %v353 = vsub.f32 %v324, %v279
    %v354 = vsub.f32 %v326, %v282
    %v355 = vsub.f32 %v328, %v285
    %v356 = vsub.f32 %v330, %v288
    %v357 = vsub.f32 %v332, %v291
    %v358 = vsub.f32 %v334, %v294
    %v359 = vsub.f32 %v336, %v297
    %v360 = vsub.f32 %v338, %v300
    %v361 = vsub.f32 %v340, %v303
    %v362 = vsub.f32 %v342, %v306
    %v363 = vsub.f32 %v344, %v309
    %v364 = vsub.f32 %v346, %v312
    %v365 = vsub.f32 %v348, %v315
    %v366 = vsub.f32 %v350, %v318
    %v367 = vsub.f32 %v351, 2.3025851
    %v368 = vsub.f32 %v352, 2.3025851
    %v369 = vsub.f32 %v353, 2.3025851
    %v370 = vsub.f32 %v354, 2.3025851
    %v371 = vsub.f32 %v355, 2.3025851
    %v372 = vsub.f32 %v356, 2.3025851
    %v373 = vsub.f32 %v357, 2.3025851
    %v374 = vsub.f32 %v358, 2.3025851
    %v375 = vsub.f32 %v359, 2.3025851
    %v376 = vsub.f32 %v360, 2.3025851
    %v377 = vsub.f32 %v361, 2.3025851
    %v378 = vsub.f32 %v362, 2.3025851
    %v379 = vsub.f32 %v363, 2.3025851
    %v380 = vsub.f32 %v364, 2.3025851
    %v381 = vsub.f32 %v365, 2.3025851
    %v382 = vsub.f32 %v366, 2.3025851
    %v383 = vmul.f32 %v367, 0.5
    %v384 = vmul.f32 %v368, 0.5
    %v385 = vmul.f32 %v369, 0.5
    %v386 = vmul.f32 %v370, 0.5
    %v387 = vmul.f32 %v371, 0.5
    %v388 = vmul.f32 %v372, 0.5
    %v389 = vmul.f32 %v373, 0.5
    %v390 = vmul.f32 %v374, 0.5
    %v391 = vmul.f32 %v375, 0.5
    %v392 = vmul.f32 %v376, 0.5
    %v393 = vmul.f32 %v377, 0.5
    %v394 = vmul.f32 %v378, 0.5
    %v395 = vmul.f32 %v379, 0.5
    %v396 = vmul.f32 %v380, 0.5
    %v397 = vmul.f32 %v381, 0.5
    %v398 = vmul.f32 %v382, 0.5
    %v399 = vmax.f32 %v383, -0.7357589
    %v400 = vmax.f32 %v384, -0.7357589
    %v401 = vmax.f32 %v385, -0.7357589
    %v402 = vmax.f32 %v386, -0.7357589
    %v403 = vmax.f32 %v387, -0.7357589
    %v404 = vmax.f32 %v388, -0.7357589
    %v405 = vmax.f32 %v389, -0.7357589
    %v406 = vmax.f32 %v390, -0.7357589
    %v407 = vmax.f32 %v391, -0.7357589
    %v408 = vmax.f32 %v392, -0.7357589
    %v409 = vmax.f32 %v393, -0.7357589
    %v410 = vmax.f32 %v394, -0.7357589
    %v411 = vmax.f32 %v395, -0.7357589
    %v412 = vmax.f32 %v396, -0.7357589
    %v413 = vmax.f32 %v397, -0.7357589
    %v414 = vmax.f32 %v398, -0.7357589
    %v415 = vmul.f32 %v399, 0.5
    %v416 = vmul.f32 %v400, 0.5
    %v417 = vmul.f32 %v401, 0.5
    %v418 = vmul.f32 %v402, 0.5
    %v419 = vmul.f32 %v403, 0.5
    %v420 = vmul.f32 %v404, 0.5
    %v421 = vmul.f32 %v405, 0.5
    %v422 = vmul.f32 %v406, 0.5
    %v423 = vmul.f32 %v407, 0.5
    %v424 = vmul.f32 %v408, 0.5
    %v425 = vmul.f32 %v409, 0.5
    %v426 = vmul.f32 %v410, 0.5
    %v427 = vmul.f32 %v411, 0.5
    %v428 = vmul.f32 %v412, 0.5
    %v429 = vmul.f32 %v413, 0.5
    %v430 = vmul.f32 %v414, 0.5
    %v431 = vmul.f32 %v415, 2.7182817
    %v432 = vmul.f32 %v416, 2.7182817
    %v433 = vmul.f32 %v417, 2.7182817
    %v434 = vmul.f32 %v418, 2.7182817
    %v435 = vmul.f32 %v419, 2.7182817
    %v436 = vmul.f32 %v420, 2.7182817
    %v437 = vmul.f32 %v421, 2.7182817
    %v438 = vmul.f32 %v422, 2.7182817
    %v439 = vmul.f32 %v423, 2.7182817
    %v440 = vmul.f32 %v424, 2.7182817
    %v441 = vmul.f32 %v425, 2.7182817
    %v442 = vmul.f32 %v426, 2.7182817
    %v443 = vmul.f32 %v427, 2.7182817
    %v444 = vmul.f32 %v428, 2.7182817
    %v445 = vmul.f32 %v429, 2.7182817
    %v446 = vmul.f32 %v430, 2.7182817
    %v447 = vadd.f32 %v431, 1.0
    %v448 = vadd.f32 %v432, 1.0
    %v449 = vadd.f32 %v433, 1.0
    %v450 = vadd.f32 %v434, 1.0
    %v451 = vadd.f32 %v435, 1.0
    %v452 = vadd.f32 %v436, 1.0
    %v453 = vadd.f32 %v437, 1.0
    %v454 = vadd.f32 %v438, 1.0
    %v455 = vadd.f32 %v439, 1.0
    %v456 = vadd.f32 %v440, 1.0
    %v457 = vadd.f32 %v441, 1.0
    %v458 = vadd.f32 %v442, 1.0
    %v459 = vadd.f32 %v443, 1.0
    %v460 = vadd.f32 %v444, 1.0
    %v461 = vadd.f32 %v445, 1.0
    %v462 = vadd.f32 %v446, 1.0
    %v463 = vmax.f32 %v447, 0.0
    %v464 = vmax.f32 %v448, 0.0
    %v465 = vmax.f32 %v449, 0.0
    %v466 = vmax.f32 %v450, 0.0
    %v467 = vmax.f32 %v451, 0.0
    %v468 = vmax.f32 %v452, 0.0
    %v469 = vmax.f32 %v453, 0.0
    %v470 = vmax.f32 %v454, 0.0
    %v471 = vmax.f32 %v455, 0.0
    %v472 = vmax.f32 %v456, 0.0
    %v473 = vmax.f32 %v457, 0.0
    %v474 = vmax.f32 %v458, 0.0
    %v475 = vmax.f32 %v459, 0.0
    %v476 = vmax.f32 %v460, 0.0
    %v477 = vmax.f32 %v461, 0.0
    %v478 = vmax.f32 %v462, 0.0
    %vm479 = vcmp.lt.f32.partialorder %v463, 1e-05
    %vm480 = vcmp.lt.f32.partialorder %v464, 1e-05
    %vm481 = vcmp.lt.f32.partialorder %v465, 1e-05
    %vm482 = vcmp.lt.f32.partialorder %v466, 1e-05
    %vm483 = vcmp.lt.f32.partialorder %v467, 1e-05
    %vm484 = vcmp.lt.f32.partialorder %v468, 1e-05
    %vm485 = vcmp.lt.f32.partialorder %v469, 1e-05
    %vm486 = vcmp.lt.f32.partialorder %v470, 1e-05
    %vm487 = vcmp.lt.f32.partialorder %v471, 1e-05
    %vm488 = vcmp.lt.f32.partialorder %v472, 1e-05
    %vm489 = vcmp.lt.f32.partialorder %v473, 1e-05
    %vm490 = vcmp.lt.f32.partialorder %v474, 1e-05
    %vm491 = vcmp.lt.f32.partialorder %v475, 1e-05
    %vm492 = vcmp.lt.f32.partialorder %v476, 1e-05
    %vm493 = vcmp.lt.f32.partialorder %v477, 1e-05
    %vm494 = vcmp.lt.f32.partialorder %v478, 1e-05
    %v495 = vmul.f32 %v463, 2.0
    %v496 = vmul.f32 %v464, 2.0
    %v497 = vmul.f32 %v465, 2.0
    %v498 = vmul.f32 %v466, 2.0
    %v499 = vmul.f32 %v467, 2.0
    %v500 = vmul.f32 %v468, 2.0
    %v501 = vmul.f32 %v469, 2.0
    %v502 = vmul.f32 %v470, 2.0
    %v503 = vmul.f32 %v471, 2.0
    %v504 = vmul.f32 %v472, 2.0
    %v505 = vmul.f32 %v473, 2.0
    %v506 = vmul.f32 %v474, 2.0
    %v507 = vmul.f32 %v475, 2.0
    %v508 = vmul.f32 %v476, 2.0
    %v509 = vmul.f32 %v477, 2.0
    %v510 = vmul.f32 %v478, 2.0
    %v511 = vrsqrt.pop %v495
    %v512 = vmul.f32 %v495, %v511
    %vm513 = vcmp.eq.f32.partialorder %v495, inf
    %v514 = vsel %vm513, %v495, %v512
    %vm515 = vcmp.eq.f32.partialorder %v495, 0.0
    %v516 = vand.u32 %v495, 2147483648
    %v517 = vsel %vm515, %v516, %v514
    %v518 = vrsqrt.pop %v496
    %v519 = vmul.f32 %v496, %v518
    %vm520 = vcmp.eq.f32.partialorder %v496, inf
    %v521 = vsel %vm520, %v496, %v519
    %vm522 = vcmp.eq.f32.partialorder %v496, 0.0
    %v523 = vand.u32 %v496, 2147483648
    %v524 = vsel %vm522, %v523, %v521
    %v525 = vrsqrt.pop %v497
    %v526 = vmul.f32 %v497, %v525
    %vm527 = vcmp.eq.f32.partialorder %v497, inf
    %v528 = vsel %vm527, %v497, %v526
    %vm529 = vcmp.eq.f32.partialorder %v497, 0.0
    %v530 = vand.u32 %v497, 2147483648
    %v531 = vsel %vm529, %v530, %v528
    %v532 = vrsqrt.pop %v498
    %v533 = vmul.f32 %v498, %v532
    %vm534 = vcmp.eq.f32.partialorder %v498, inf
    %v535 = vsel %vm534, %v498, %v533
    %vm536 = vcmp.eq.f32.partialorder %v498, 0.0
    %v537 = vand.u32 %v498, 2147483648
    %v538 = vsel %vm536, %v537, %v535
    %v539 = vrsqrt.pop %v499
    %v540 = vmul.f32 %v499, %v539
    %vm541 = vcmp.eq.f32.partialorder %v499, inf
    %v542 = vsel %vm541, %v499, %v540
    %vm543 = vcmp.eq.f32.partialorder %v499, 0.0
    %v544 = vand.u32 %v499, 2147483648
    %v545 = vsel %vm543, %v544, %v542
    %v546 = vrsqrt.pop %v500
    %v547 = vmul.f32 %v500, %v546
    %vm548 = vcmp.eq.f32.partialorder %v500, inf
    %v549 = vsel %vm548, %v500, %v547
    %vm550 = vcmp.eq.f32.partialorder %v500, 0.0
    %v551 = vand.u32 %v500, 2147483648
    %v552 = vsel %vm550, %v551, %v549
    %v553 = vrsqrt.pop %v501
    %v554 = vmul.f32 %v501, %v553
    %vm555 = vcmp.eq.f32.partialorder %v501, inf
    %v556 = vsel %vm555, %v501, %v554
    %vm557 = vcmp.eq.f32.partialorder %v501, 0.0
    %v558 = vand.u32 %v501, 2147483648
    %v559 = vsel %vm557, %v558, %v556
    %v560 = vrsqrt.pop %v502
    %v561 = vmul.f32 %v502, %v560
    %vm562 = vcmp.eq.f32.partialorder %v502, inf
    %v563 = vsel %vm562, %v502, %v561
    %vm564 = vcmp.eq.f32.partialorder %v502, 0.0
    %v565 = vand.u32 %v502, 2147483648
    %v566 = vsel %vm564, %v565, %v563
    %v567 = vrsqrt.pop %v503
    %v568 = vmul.f32 %v503, %v567
    %vm569 = vcmp.eq.f32.partialorder %v503, inf
    %v570 = vsel %vm569, %v503, %v568
    %vm571 = vcmp.eq.f32.partialorder %v503, 0.0
    %v572 = vand.u32 %v503, 2147483648
    %v573 = vsel %vm571, %v572, %v570
    %v574 = vrsqrt.pop %v504
    %v575 = vmul.f32 %v504, %v574
    %vm576 = vcmp.eq.f32.partialorder %v504, inf
    %v577 = vsel %vm576, %v504, %v575
    %vm578 = vcmp.eq.f32.partialorder %v504, 0.0
    %v579 = vand.u32 %v504, 2147483648
    %v580 = vsel %vm578, %v579, %v577
    %v581 = vrsqrt.pop %v505
    %v582 = vmul.f32 %v505, %v581
    %vm583 = vcmp.eq.f32.partialorder %v505, inf
    %v584 = vsel %vm583, %v505, %v582
    %vm585 = vcmp.eq.f32.partialorder %v505, 0.0
    %v586 = vand.u32 %v505, 2147483648
    %v587 = vsel %vm585, %v586, %v584
    %v588 = vrsqrt.pop %v506
    %v589 = vmul.f32 %v506, %v588
    %vm590 = vcmp.eq.f32.partialorder %v506, inf
    %v591 = vsel %vm590, %v506, %v589
    %vm592 = vcmp.eq.f32.partialorder %v506, 0.0
    %v593 = vand.u32 %v506, 2147483648
    %v594 = vsel %vm592, %v593, %v591
    %v595 = vrsqrt.pop %v507
    %v596 = vmul.f32 %v507, %v595
    %vm597 = vcmp.eq.f32.partialorder %v507, inf
    %v598 = vsel %vm597, %v507, %v596
    %vm599 = vcmp.eq.f32.partialorder %v507, 0.0
    %v600 = vand.u32 %v507, 2147483648
    %v601 = vsel %vm599, %v600, %v598
    %v602 = vrsqrt.pop %v508
    %v603 = vmul.f32 %v508, %v602
    %vm604 = vcmp.eq.f32.partialorder %v508, inf
    %v605 = vsel %vm604, %v508, %v603
    %vm606 = vcmp.eq.f32.partialorder %v508, 0.0
    %v607 = vand.u32 %v508, 2147483648
    %v608 = vsel %vm606, %v607, %v605
    %v609 = vrsqrt.pop %v509
    %v610 = vmul.f32 %v509, %v609
    %vm611 = vcmp.eq.f32.partialorder %v509, inf
    %v612 = vsel %vm611, %v509, %v610
    %vm613 = vcmp.eq.f32.partialorder %v509, 0.0
    %v614 = vand.u32 %v509, 2147483648
    %v615 = vsel %vm613, %v614, %v612
    %v616 = vrsqrt.pop %v510
    %v617 = vmul.f32 %v510, %v616
    %vm618 = vcmp.eq.f32.partialorder %v510, inf
    %v619 = vsel %vm618, %v510, %v617
    %vm620 = vcmp.eq.f32.partialorder %v510, 0.0
    %v621 = vand.u32 %v510, 2147483648
    %v622 = vsel %vm620, %v621, %v619
    %v623 = vadd.f32 %v517, -1.0
    %v624 = vadd.f32 %v524, -1.0
    %v625 = vadd.f32 %v531, -1.0
    %v626 = vadd.f32 %v538, -1.0
    %v627 = vadd.f32 %v545, -1.0
    %v628 = vadd.f32 %v552, -1.0
    %v629 = vadd.f32 %v559, -1.0
    %v630 = vadd.f32 %v566, -1.0
    %v631 = vadd.f32 %v573, -1.0
    %v632 = vadd.f32 %v580, -1.0
    %v633 = vadd.f32 %v587, -1.0
    %v634 = vadd.f32 %v594, -1.0
    %v635 = vadd.f32 %v601, -1.0
    %v636 = vadd.f32 %v608, -1.0
    %v637 = vadd.f32 %v615, -1.0
    %v638 = vadd.f32 %v622, -1.0
    %v639 = vmul.f32 %v463, 0.6666667
    %v640 = vmul.f32 %v464, 0.6666667
    %v641 = vmul.f32 %v465, 0.6666667
    %v642 = vmul.f32 %v466, 0.6666667
    %v643 = vmul.f32 %v467, 0.6666667
    %v644 = vmul.f32 %v468, 0.6666667
    %v645 = vmul.f32 %v469, 0.6666667
    %v646 = vmul.f32 %v470, 0.6666667
    %v647 = vmul.f32 %v471, 0.6666667
    %v648 = vmul.f32 %v472, 0.6666667
    %v649 = vmul.f32 %v473, 0.6666667
    %v650 = vmul.f32 %v474, 0.6666667
    %v651 = vmul.f32 %v475, 0.6666667
    %v652 = vmul.f32 %v476, 0.6666667
    %v653 = vmul.f32 %v477, 0.6666667
    %v654 = vmul.f32 %v478, 0.6666667
    %v655 = vsub.f32 %v623, %v639
    %v656 = vsub.f32 %v624, %v640
    %v657 = vsub.f32 %v625, %v641
    %v658 = vsub.f32 %v626, %v642
    %v659 = vsub.f32 %v627, %v643
    %v660 = vsub.f32 %v628, %v644
    %v661 = vsub.f32 %v629, %v645
    %v662 = vsub.f32 %v630, %v646
    %v663 = vsub.f32 %v631, %v647
    %v664 = vsub.f32 %v632, %v648
    %v665 = vsub.f32 %v633, %v649
    %v666 = vsub.f32 %v634, %v650
    %v667 = vsub.f32 %v635, %v651
    %v668 = vsub.f32 %v636, %v652
    %v669 = vsub.f32 %v637, %v653
    %v670 = vsub.f32 %v638, %v654
    %vm671 = vcmp.lt.f32.partialorder %v415, 0.0
    %vm672 = vcmp.lt.f32.partialorder %v416, 0.0
    %vm673 = vcmp.lt.f32.partialorder %v417, 0.0
    %vm674 = vcmp.lt.f32.partialorder %v418, 0.0
    %vm675 = vcmp.lt.f32.partialorder %v419, 0.0
    %vm676 = vcmp.lt.f32.partialorder %v420, 0.0
    %vm677 = vcmp.lt.f32.partialorder %v421, 0.0
    %vm678 = vcmp.lt.f32.partialorder %v422, 0.0
    %vm679 = vcmp.lt.f32.partialorder %v423, 0.0
    %vm680 = vcmp.lt.f32.partialorder %v424, 0.0
    %vm681 = vcmp.lt.f32.partialorder %v425, 0.0
    %vm682 = vcmp.lt.f32.partialorder %v426, 0.0
    %vm683 = vcmp.lt.f32.partialorder %v427, 0.0
    %vm684 = vcmp.lt.f32.partialorder %v428, 0.0
    %vm685 = vcmp.lt.f32.partialorder %v429, 0.0
    %vm686 = vcmp.lt.f32.partialorder %v430, 0.0
    %v687 = vmax.f32 %v415, 0.0
    %v688 = vmax.f32 %v416, 0.0
    %v689 = vmax.f32 %v417, 0.0
    %v690 = vmax.f32 %v418, 0.0
    %v691 = vmax.f32 %v419, 0.0
    %v692 = vmax.f32 %v420, 0.0
    %v693 = vmax.f32 %v421, 0.0
    %v694 = vmax.f32 %v422, 0.0
    %v695 = vmax.f32 %v423, 0.0
    %v696 = vmax.f32 %v424, 0.0
    %v697 = vmax.f32 %v425, 0.0
    %v698 = vmax.f32 %v426, 0.0
    %v699 = vmax.f32 %v427, 0.0
    %v700 = vmax.f32 %v428, 0.0
    %v701 = vmax.f32 %v429, 0.0
    %v702 = vmax.f32 %v430, 0.0
    %v703 = vadd.f32 %v687, 1.0
    %v704 = vlog2.pop %v703
    %v705 = vmul.f32 %v704, 0.6931472
    %v706 = vmul.f32 -0.5, %v687
    %v707 = vadd.f32 %v706, 1.0
    %v708 = vmul.f32 %v707, %v687
    %v709 = vand.u32 2147483647, %v687
    %vm710 = vcmp.lt.f32.partialorder %v709, 0.0004427343
    %v711 = vsel %vm710, %v708, %v705
    %v712 = vadd.f32 %v688, 1.0
    %v713 = vlog2.pop %v712
    %v714 = vmul.f32 %v713, 0.6931472
    %v715 = vmul.f32 -0.5, %v688
    %v716 = vadd.f32 %v715, 1.0
    %v717 = vmul.f32 %v716, %v688
    %v718 = vand.u32 2147483647, %v688
    %vm719 = vcmp.lt.f32.partialorder %v718, 0.0004427343
    %v720 = vsel %vm719, %v717, %v714
    %v721 = vadd.f32 %v689, 1.0
    %v722 = vlog2.pop %v721
    %v723 = vmul.f32 %v722, 0.6931472
    %v724 = vmul.f32 -0.5, %v689
    %v725 = vadd.f32 %v724, 1.0
    %v726 = vmul.f32 %v725, %v689
    %v727 = vand.u32 2147483647, %v689
    %vm728 = vcmp.lt.f32.partialorder %v727, 0.0004427343
    %v729 = vsel %vm728, %v726, %v723
    %v730 = vadd.f32 %v690, 1.0
    %v731 = vlog2.pop %v730
    %v732 = vmul.f32 %v731, 0.6931472
    %v733 = vmul.f32 -0.5, %v690
    %v734 = vadd.f32 %v733, 1.0
    %v735 = vmul.f32 %v734, %v690
    %v736 = vand.u32 2147483647, %v690
    %vm737 = vcmp.lt.f32.partialorder %v736, 0.0004427343
    %v738 = vsel %vm737, %v735, %v732
    %v739 = vadd.f32 %v691, 1.0
    %v740 = vlog2.pop %v739
    %v741 = vmul.f32 %v740, 0.6931472
    %v742 = vmul.f32 -0.5, %v691
    %v743 = vadd.f32 %v742, 1.0
    %v744 = vmul.f32 %v743, %v691
    %v745 = vand.u32 2147483647, %v691
    %vm746 = vcmp.lt.f32.partialorder %v745, 0.0004427343
    %v747 = vsel %vm746, %v744, %v741
    %v748 = vadd.f32 %v692, 1.0
    %v749 = vlog2.pop %v748
    %v750 = vmul.f32 %v749, 0.6931472
    %v751 = vmul.f32 -0.5, %v692
    %v752 = vadd.f32 %v751, 1.0
    %v753 = vmul.f32 %v752, %v692
    %v754 = vand.u32 2147483647, %v692
    %vm755 = vcmp.lt.f32.partialorder %v754, 0.0004427343
    %v756 = vsel %vm755, %v753, %v750
    %v757 = vadd.f32 %v693, 1.0
    %v758 = vlog2.pop %v757
    %v759 = vmul.f32 %v758, 0.6931472
    %v760 = vmul.f32 -0.5, %v693
    %v761 = vadd.f32 %v760, 1.0
    %v762 = vmul.f32 %v761, %v693
    %v763 = vand.u32 2147483647, %v693
    %vm764 = vcmp.lt.f32.partialorder %v763, 0.0004427343
    %v765 = vsel %vm764, %v762, %v759
    %v766 = vadd.f32 %v694, 1.0
    %v767 = vlog2.pop %v766
    %v768 = vmul.f32 %v767, 0.6931472
    %v769 = vmul.f32 -0.5, %v694
    %v770 = vadd.f32 %v769, 1.0
    %v771 = vmul.f32 %v770, %v694
    %v772 = vand.u32 2147483647, %v694
    %vm773 = vcmp.lt.f32.partialorder %v772, 0.0004427343
    %v774 = vsel %vm773, %v771, %v768
    %v775 = vadd.f32 %v695, 1.0
    %v776 = vlog2.pop %v775
    %v777 = vmul.f32 %v776, 0.6931472
    %v778 = vmul.f32 -0.5, %v695
    %v779 = vadd.f32 %v778, 1.0
    %v780 = vmul.f32 %v779, %v695
    %v781 = vand.u32 2147483647, %v695
    %vm782 = vcmp.lt.f32.partialorder %v781, 0.0004427343
    %v783 = vsel %vm782, %v780, %v777
    %v784 = vadd.f32 %v696, 1.0
    %v785 = vlog2.pop %v784
    %v786 = vmul.f32 %v785, 0.6931472
    %v787 = vmul.f32 -0.5, %v696
    %v788 = vadd.f32 %v787, 1.0
    %v789 = vmul.f32 %v788, %v696
    %v790 = vand.u32 2147483647, %v696
    %vm791 = vcmp.lt.f32.partialorder %v790, 0.0004427343
    %v792 = vsel %vm791, %v789, %v786
    %v793 = vadd.f32 %v697, 1.0
    %v794 = vlog2.pop %v793
    %v795 = vmul.f32 %v794, 0.6931472
    %v796 = vmul.f32 -0.5, %v697
    %v797 = vadd.f32 %v796, 1.0
    %v798 = vmul.f32 %v797, %v697
    %v799 = vand.u32 2147483647, %v697
    %vm800 = vcmp.lt.f32.partialorder %v799, 0.0004427343
    %v801 = vsel %vm800, %v798, %v795
    %v802 = vadd.f32 %v698, 1.0
    %v803 = vlog2.pop %v802
    %v804 = vmul.f32 %v803, 0.6931472
    %v805 = vmul.f32 -0.5, %v698
    %v806 = vadd.f32 %v805, 1.0
    %v807 = vmul.f32 %v806, %v698
    %v808 = vand.u32 2147483647, %v698
    %vm809 = vcmp.lt.f32.partialorder %v808, 0.0004427343
    %v810 = vsel %vm809, %v807, %v804
    %v811 = vadd.f32 %v699, 1.0
    %v812 = vlog2.pop %v811
    %v813 = vmul.f32 %v812, 0.6931472
    %v814 = vmul.f32 -0.5, %v699
    %v815 = vadd.f32 %v814, 1.0
    %v816 = vmul.f32 %v815, %v699
    %v817 = vand.u32 2147483647, %v699
    %vm818 = vcmp.lt.f32.partialorder %v817, 0.0004427343
    %v819 = vsel %vm818, %v816, %v813
    %v820 = vadd.f32 %v700, 1.0
    %v821 = vlog2.pop %v820
    %v822 = vmul.f32 %v821, 0.6931472
    %v823 = vmul.f32 -0.5, %v700
    %v824 = vadd.f32 %v823, 1.0
    %v825 = vmul.f32 %v824, %v700
    %v826 = vand.u32 2147483647, %v700
    %vm827 = vcmp.lt.f32.partialorder %v826, 0.0004427343
    %v828 = vsel %vm827, %v825, %v822
    %v829 = vadd.f32 %v701, 1.0
    %v830 = vlog2.pop %v829
    %v831 = vmul.f32 %v830, 0.6931472
    %v832 = vmul.f32 -0.5, %v701
    %v833 = vadd.f32 %v832, 1.0
    %v834 = vmul.f32 %v833, %v701
    %v835 = vand.u32 2147483647, %v701
    %vm836 = vcmp.lt.f32.partialorder %v835, 0.0004427343
    %v837 = vsel %vm836, %v834, %v831
    %v838 = vadd.f32 %v702, 1.0
    %v839 = vlog2.pop %v838
    %v840 = vmul.f32 %v839, 0.6931472
    %v841 = vmul.f32 -0.5, %v702
    %v842 = vadd.f32 %v841, 1.0
    %v843 = vmul.f32 %v842, %v702
    %v844 = vand.u32 2147483647, %v702
    %vm845 = vcmp.lt.f32.partialorder %v844, 0.0004427343
    %v846 = vsel %vm845, %v843, %v840
    %v847 = vsel %vm671, %v655, %v711
    %v848 = vsel %vm672, %v656, %v720
    %v849 = vsel %vm673, %v657, %v729
    %v850 = vsel %vm674, %v658, %v738
    %v851 = vsel %vm675, %v659, %v747
    %v852 = vsel %vm676, %v660, %v756
    %v853 = vsel %vm677, %v661, %v765
    %v854 = vsel %vm678, %v662, %v774
    %v855 = vsel %vm679, %v663, %v783
    %v856 = vsel %vm680, %v664, %v792
    %v857 = vsel %vm681, %v665, %v801
    %v858 = vsel %vm682, %v666, %v810
    %v859 = vsel %vm683, %v667, %v819
    %v860 = vsel %vm684, %v668, %v828
    %v861 = vsel %vm685, %v669, %v837
    %v862 = vsel %vm686, %v670, %v846
    %v863 = vmul.f32 %v847, 1.442695
    %v864 = vpow.pop %v863
    %v865 = vmul.f32 %v848, 1.442695
    %v866 = vpow.pop %v865
    %v867 = vmul.f32 %v849, 1.442695
    %v868 = vpow.pop %v867
    %v869 = vmul.f32 %v850, 1.442695
    %v870 = vpow.pop %v869
    %v871 = vmul.f32 %v851, 1.442695
    %v872 = vpow.pop %v871
    %v873 = vmul.f32 %v852, 1.442695
    %v874 = vpow.pop %v873
    %v875 = vmul.f32 %v853, 1.442695
    %v876 = vpow.pop %v875
    %v877 = vmul.f32 %v854, 1.442695
    %v878 = vpow.pop %v877
    %v879 = vmul.f32 %v855, 1.442695
    %v880 = vpow.pop %v879
    %v881 = vmul.f32 %v856, 1.442695
    %v882 = vpow.pop %v881
    %v883 = vmul.f32 %v857, 1.442695
    %v884 = vpow.pop %v883
    %v885 = vmul.f32 %v858, 1.442695
    %v886 = vpow.pop %v885
    %v887 = vmul.f32 %v859, 1.442695
    %v888 = vpow.pop %v887
    %v889 = vmul.f32 %v860, 1.442695
    %v890 = vpow.pop %v889
    %v891 = vmul.f32 %v861, 1.442695
    %v892 = vpow.pop %v891
    %v893 = vmul.f32 %v862, 1.442695
    %v894 = vpow.pop %v893
    %v895 = vmul.f32 %v847, %v864
    %v896 = vmul.f32 %v848, %v866
    %v897 = vmul.f32 %v849, %v868
    %v898 = vmul.f32 %v850, %v870
    %v899 = vmul.f32 %v851, %v872
    %v900 = vmul.f32 %v852, %v874
    %v901 = vmul.f32 %v853, %v876
    %v902 = vmul.f32 %v854, %v878
    %v903 = vmul.f32 %v855, %v880
    %v904 = vmul.f32 %v856, %v882
    %v905 = vmul.f32 %v857, %v884
    %v906 = vmul.f32 %v858, %v886
    %v907 = vmul.f32 %v859, %v888
    %v908 = vmul.f32 %v860, %v890
    %v909 = vmul.f32 %v861, %v892
    %v910 = vmul.f32 %v862, %v894
    %v911 = vsub.f32 %v895, %v415
    %v912 = vsub.f32 %v896, %v416
    %v913 = vsub.f32 %v897, %v417
    %v914 = vsub.f32 %v898, %v418
    %v915 = vsub.f32 %v899, %v419
    %v916 = vsub.f32 %v900, %v420
    %v917 = vsub.f32 %v901, %v421
    %v918 = vsub.f32 %v902, %v422
    %v919 = vsub.f32 %v903, %v423
    %v920 = vsub.f32 %v904, %v424
    %v921 = vsub.f32 %v905, %v425
    %v922 = vsub.f32 %v906, %v426
    %v923 = vsub.f32 %v907, %v427
    %v924 = vsub.f32 %v908, %v428
    %v925 = vsub.f32 %v909, %v429
    %v926 = vsub.f32 %v910, %v430
    %v927 = vadd.f32 %v847, 1.0
    %v928 = vadd.f32 %v848, 1.0
    %v929 = vadd.f32 %v849, 1.0
    %v930 = vadd.f32 %v850, 1.0
    %v931 = vadd.f32 %v851, 1.0
    %v932 = vadd.f32 %v852, 1.0
    %v933 = vadd.f32 %v853, 1.0
    %v934 = vadd.f32 %v854, 1.0
    %v935 = vadd.f32 %v855, 1.0
    %v936 = vadd.f32 %v856, 1.0
    %v937 = vadd.f32 %v857, 1.0
    %v938 = vadd.f32 %v858, 1.0
    %v939 = vadd.f32 %v859, 1.0
    %v940 = vadd.f32 %v860, 1.0
    %v941 = vadd.f32 %v861, 1.0
    %v942 = vadd.f32 %v862, 1.0
    %v943 = vmul.f32 %v927, 2.0
    %v944 = vmul.f32 %v928, 2.0
    %v945 = vmul.f32 %v929, 2.0
    %v946 = vmul.f32 %v930, 2.0
    %v947 = vmul.f32 %v931, 2.0
    %v948 = vmul.f32 %v932, 2.0
    %v949 = vmul.f32 %v933, 2.0
    %v950 = vmul.f32 %v934, 2.0
    %v951 = vmul.f32 %v935, 2.0
    %v952 = vmul.f32 %v936, 2.0
    %v953 = vmul.f32 %v937, 2.0
    %v954 = vmul.f32 %v938, 2.0
    %v955 = vmul.f32 %v939, 2.0
    %v956 = vmul.f32 %v940, 2.0
    %v957 = vmul.f32 %v941, 2.0
    %v958 = vmul.f32 %v942, 2.0
    %v959 = vmul.f32 %v911, %v943
    %v960 = vmul.f32 %v912, %v944
    %v961 = vmul.f32 %v913, %v945
    %v962 = vmul.f32 %v914, %v946
    %v963 = vmul.f32 %v915, %v947
    %v964 = vmul.f32 %v916, %v948
    %v965 = vmul.f32 %v917, %v949
    %v966 = vmul.f32 %v918, %v950
    %v967 = vmul.f32 %v919, %v951
    %v968 = vmul.f32 %v920, %v952
    %v969 = vmul.f32 %v921, %v953
    %v970 = vmul.f32 %v922, %v954
    %v971 = vmul.f32 %v923, %v955
    %v972 = vmul.f32 %v924, %v956
    %v973 = vmul.f32 %v925, %v957
    %v974 = vmul.f32 %v926, %v958
    %v975 = vmul.f32 %v864, 2.0
    %v976 = vmul.f32 %v866, 2.0
    %v977 = vmul.f32 %v868, 2.0
    %v978 = vmul.f32 %v870, 2.0
    %v979 = vmul.f32 %v872, 2.0
    %v980 = vmul.f32 %v874, 2.0
    %v981 = vmul.f32 %v876, 2.0
    %v982 = vmul.f32 %v878, 2.0
    %v983 = vmul.f32 %v880, 2.0
    %v984 = vmul.f32 %v882, 2.0
    %v985 = vmul.f32 %v884, 2.0
    %v986 = vmul.f32 %v886, 2.0
    %v987 = vmul.f32 %v888, 2.0
    %v988 = vmul.f32 %v890, 2.0
    %v989 = vmul.f32 %v892, 2.0
    %v990 = vmul.f32 %v894, 2.0
    %v991 = vmul.f32 %v975, %v927
    %v992 = vmul.f32 %v976, %v928
    %v993 = vmul.f32 %v977, %v929
    %v994 = vmul.f32 %v978, %v930
    %v995 = vmul.f32 %v979, %v931
    %v996 = vmul.f32 %v980, %v932
    %v997 = vmul.f32 %v981, %v933
    %v998 = vmul.f32 %v982, %v934
    %v999 = vmul.f32 %v983, %v935
    %v1000 = vmul.f32 %v984, %v936
    %v1001 = vmul.f32 %v985, %v937
    %v1002 = vmul.f32 %v986, %v938
    %v1003 = vmul.f32 %v987, %v939
    %v1004 = vmul.f32 %v988, %v940
    %v1005 = vmul.f32 %v989, %v941
    %v1006 = vmul.f32 %v990, %v942
    %v1007 = vmul.f32 %v991, %v927
    %v1008 = vmul.f32 %v992, %v928
    %v1009 = vmul.f32 %v993, %v929
    %v1010 = vmul.f32 %v994, %v930
    %v1011 = vmul.f32 %v995, %v931
    %v1012 = vmul.f32 %v996, %v932
    %v1013 = vmul.f32 %v997, %v933
    %v1014 = vmul.f32 %v998, %v934
    %v1015 = vmul.f32 %v999, %v935
    %v1016 = vmul.f32 %v1000, %v936
    %v1017 = vmul.f32 %v1001, %v937
    %v1018 = vmul.f32 %v1002, %v938
    %v1019 = vmul.f32 %v1003, %v939
    %v1020 = vmul.f32 %v1004, %v940
    %v1021 = vmul.f32 %v1005, %v941
    %v1022 = vmul.f32 %v1006, %v942
    %v1023 = vadd.f32 %v847, 2.0
    %v1024 = vadd.f32 %v848, 2.0
    %v1025 = vadd.f32 %v849, 2.0
    %v1026 = vadd.f32 %v850, 2.0
    %v1027 = vadd.f32 %v851, 2.0
    %v1028 = vadd.f32 %v852, 2.0
    %v1029 = vadd.f32 %v853, 2.0
    %v1030 = vadd.f32 %v854, 2.0
    %v1031 = vadd.f32 %v855, 2.0
    %v1032 = vadd.f32 %v856, 2.0
    %v1033 = vadd.f32 %v857, 2.0
    %v1034 = vadd.f32 %v858, 2.0
    %v1035 = vadd.f32 %v859, 2.0
    %v1036 = vadd.f32 %v860, 2.0
    %v1037 = vadd.f32 %v861, 2.0
    %v1038 = vadd.f32 %v862, 2.0
    %v1039 = vmul.f32 %v1023, %v911
    %v1040 = vmul.f32 %v1024, %v912
    %v1041 = vmul.f32 %v1025, %v913
    %v1042 = vmul.f32 %v1026, %v914
    %v1043 = vmul.f32 %v1027, %v915
    %v1044 = vmul.f32 %v1028, %v916
    %v1045 = vmul.f32 %v1029, %v917
    %v1046 = vmul.f32 %v1030, %v918
    %v1047 = vmul.f32 %v1031, %v919
    %v1048 = vmul.f32 %v1032, %v920
    %v1049 = vmul.f32 %v1033, %v921
    %v1050 = vmul.f32 %v1034, %v922
    %v1051 = vmul.f32 %v1035, %v923
    %v1052 = vmul.f32 %v1036, %v924
    %v1053 = vmul.f32 %v1037, %v925
    %v1054 = vmul.f32 %v1038, %v926
    %v1055 = vsub.f32 %v1007, %v1039
    %v1056 = vsub.f32 %v1008, %v1040
    %v1057 = vsub.f32 %v1009, %v1041
    %v1058 = vsub.f32 %v1010, %v1042
    %v1059 = vsub.f32 %v1011, %v1043
    %v1060 = vsub.f32 %v1012, %v1044
    %v1061 = vsub.f32 %v1013, %v1045
    %v1062 = vsub.f32 %v1014, %v1046
    %v1063 = vsub.f32 %v1015, %v1047
    %v1064 = vsub.f32 %v1016, %v1048
    %v1065 = vsub.f32 %v1017, %v1049
    %v1066 = vsub.f32 %v1018, %v1050
    %v1067 = vsub.f32 %v1019, %v1051
    %v1068 = vsub.f32 %v1020, %v1052
    %v1069 = vsub.f32 %v1021, %v1053
    %v1070 = vsub.f32 %v1022, %v1054
    %v1071 = vand.u32 2147483647, %v1055
    %v1072 = vand.u32 2147483647, %v1056
    %v1073 = vand.u32 2147483647, %v1057
    %v1074 = vand.u32 2147483647, %v1058
    %v1075 = vand.u32 2147483647, %v1059
    %v1076 = vand.u32 2147483647, %v1060
    %v1077 = vand.u32 2147483647, %v1061
    %v1078 = vand.u32 2147483647, %v1062
    %v1079 = vand.u32 2147483647, %v1063
    %v1080 = vand.u32 2147483647, %v1064
    %v1081 = vand.u32 2147483647, %v1065
    %v1082 = vand.u32 2147483647, %v1066
    %v1083 = vand.u32 2147483647, %v1067
    %v1084 = vand.u32 2147483647, %v1068
    %v1085 = vand.u32 2147483647, %v1069
    %v1086 = vand.u32 2147483647, %v1070
    %vm1087 = vcmp.lt.f32.partialorder %v1071, 1e-30
    %vm1088 = vcmp.lt.f32.partialorder %v1072, 1e-30
    %vm1089 = vcmp.lt.f32.partialorder %v1073, 1e-30
    %vm1090 = vcmp.lt.f32.partialorder %v1074, 1e-30
    %vm1091 = vcmp.lt.f32.partialorder %v1075, 1e-30
    %vm1092 = vcmp.lt.f32.partialorder %v1076, 1e-30
    %vm1093 = vcmp.lt.f32.partialorder %v1077, 1e-30
    %vm1094 = vcmp.lt.f32.partialorder %v1078, 1e-30
    %vm1095 = vcmp.lt.f32.partialorder %v1079, 1e-30
    %vm1096 = vcmp.lt.f32.partialorder %v1080, 1e-30
    %vm1097 = vcmp.lt.f32.partialorder %v1081, 1e-30
    %vm1098 = vcmp.lt.f32.partialorder %v1082, 1e-30
    %vm1099 = vcmp.lt.f32.partialorder %v1083, 1e-30
    %vm1100 = vcmp.lt.f32.partialorder %v1084, 1e-30
    %vm1101 = vcmp.lt.f32.partialorder %v1085, 1e-30
    %vm1102 = vcmp.lt.f32.partialorder %v1086, 1e-30
    %vm1103 = vcmp.lt.f32.partialorder %v1055, 0.0
    %vm1104 = vcmp.lt.f32.partialorder %v1056, 0.0
    %vm1105 = vcmp.lt.f32.partialorder %v1057, 0.0
    %vm1106 = vcmp.lt.f32.partialorder %v1058, 0.0
    %vm1107 = vcmp.lt.f32.partialorder %v1059, 0.0
    %vm1108 = vcmp.lt.f32.partialorder %v1060, 0.0
    %vm1109 = vcmp.lt.f32.partialorder %v1061, 0.0
    %vm1110 = vcmp.lt.f32.partialorder %v1062, 0.0
    %vm1111 = vcmp.lt.f32.partialorder %v1063, 0.0
    %vm1112 = vcmp.lt.f32.partialorder %v1064, 0.0
    %vm1113 = vcmp.lt.f32.partialorder %v1065, 0.0
    %vm1114 = vcmp.lt.f32.partialorder %v1066, 0.0
    %vm1115 = vcmp.lt.f32.partialorder %v1067, 0.0
    %vm1116 = vcmp.lt.f32.partialorder %v1068, 0.0
    %vm1117 = vcmp.lt.f32.partialorder %v1069, 0.0
    %vm1118 = vcmp.lt.f32.partialorder %v1070, 0.0
    %v1119 = vsel %vm1103, -1e-30, 1e-30
    %v1120 = vsel %vm1104, -1e-30, 1e-30
    %v1121 = vsel %vm1105, -1e-30, 1e-30
    %v1122 = vsel %vm1106, -1e-30, 1e-30
    %v1123 = vsel %vm1107, -1e-30, 1e-30
    %v1124 = vsel %vm1108, -1e-30, 1e-30
    %v1125 = vsel %vm1109, -1e-30, 1e-30
    %v1126 = vsel %vm1110, -1e-30, 1e-30
    %v1127 = vsel %vm1111, -1e-30, 1e-30
    %v1128 = vsel %vm1112, -1e-30, 1e-30
    %v1129 = vsel %vm1113, -1e-30, 1e-30
    %v1130 = vsel %vm1114, -1e-30, 1e-30
    %v1131 = vsel %vm1115, -1e-30, 1e-30
    %v1132 = vsel %vm1116, -1e-30, 1e-30
    %v1133 = vsel %vm1117, -1e-30, 1e-30
    %v1134 = vsel %vm1118, -1e-30, 1e-30
    %v1135 = vsel %vm1087, %v1119, %v1055
    %v1136 = vsel %vm1088, %v1120, %v1056
    %v1137 = vsel %vm1089, %v1121, %v1057
    %v1138 = vsel %vm1090, %v1122, %v1058
    %v1139 = vsel %vm1091, %v1123, %v1059
    %v1140 = vsel %vm1092, %v1124, %v1060
    %v1141 = vsel %vm1093, %v1125, %v1061
    %v1142 = vsel %vm1094, %v1126, %v1062
    %v1143 = vsel %vm1095, %v1127, %v1063
    %v1144 = vsel %vm1096, %v1128, %v1064
    %v1145 = vsel %vm1097, %v1129, %v1065
    %v1146 = vsel %vm1098, %v1130, %v1066
    %v1147 = vsel %vm1099, %v1131, %v1067
    %v1148 = vsel %vm1100, %v1132, %v1068
    %v1149 = vsel %vm1101, %v1133, %v1069
    %v1150 = vsel %vm1102, %v1134, %v1070
    %v1151 = vrcp.pop %v1135
    %v1152 = vrcp.pop %v1136
    %v1153 = vrcp.pop %v1137
    %v1154 = vrcp.pop %v1138
    %v1155 = vrcp.pop %v1139
    %v1156 = vrcp.pop %v1140
    %v1157 = vrcp.pop %v1141
    %v1158 = vrcp.pop %v1142
    %v1159 = vrcp.pop %v1143
    %v1160 = vrcp.pop %v1144
    %v1161 = vrcp.pop %v1145
    %v1162 = vrcp.pop %v1146
    %v1163 = vrcp.pop %v1147
    %v1164 = vrcp.pop %v1148
    %v1165 = vrcp.pop %v1149
    %v1166 = vrcp.pop %v1150
    %v1167 = vmul.f32 %v959, %v1151
    %v1168 = vmul.f32 %v960, %v1152
    %v1169 = vmul.f32 %v961, %v1153
    %v1170 = vmul.f32 %v962, %v1154
    %v1171 = vmul.f32 %v963, %v1155
    %v1172 = vmul.f32 %v964, %v1156
    %v1173 = vmul.f32 %v965, %v1157
    %v1174 = vmul.f32 %v966, %v1158
    %v1175 = vmul.f32 %v967, %v1159
    %v1176 = vmul.f32 %v968, %v1160
    %v1177 = vmul.f32 %v969, %v1161
    %v1178 = vmul.f32 %v970, %v1162
    %v1179 = vmul.f32 %v971, %v1163
    %v1180 = vmul.f32 %v972, %v1164
    %v1181 = vmul.f32 %v973, %v1165
    %v1182 = vmul.f32 %v974, %v1166
    %v1183 = vsub.f32 %v847, %v1167
    %v1184 = vsub.f32 %v848, %v1168
    %v1185 = vsub.f32 %v849, %v1169
    %v1186 = vsub.f32 %v850, %v1170
    %v1187 = vsub.f32 %v851, %v1171
    %v1188 = vsub.f32 %v852, %v1172
    %v1189 = vsub.f32 %v853, %v1173
    %v1190 = vsub.f32 %v854, %v1174
    %v1191 = vsub.f32 %v855, %v1175
    %v1192 = vsub.f32 %v856, %v1176
    %v1193 = vsub.f32 %v857, %v1177
    %v1194 = vsub.f32 %v858, %v1178
    %v1195 = vsub.f32 %v859, %v1179
    %v1196 = vsub.f32 %v860, %v1180
    %v1197 = vsub.f32 %v861, %v1181
    %v1198 = vsub.f32 %v862, %v1182
    %v1199 = vsel %vm479, %v847, %v1183
    %v1200 = vsel %vm480, %v848, %v1184
    %v1201 = vsel %vm481, %v849, %v1185
    %v1202 = vsel %vm482, %v850, %v1186
    %v1203 = vsel %vm483, %v851, %v1187
    %v1204 = vsel %vm484, %v852, %v1188
    %v1205 = vsel %vm485, %v853, %v1189
    %v1206 = vsel %vm486, %v854, %v1190
    %v1207 = vsel %vm487, %v855, %v1191
    %v1208 = vsel %vm488, %v856, %v1192
    %v1209 = vsel %vm489, %v857, %v1193
    %v1210 = vsel %vm490, %v858, %v1194
    %v1211 = vsel %vm491, %v859, %v1195
    %v1212 = vsel %vm492, %v860, %v1196
    %v1213 = vsel %vm493, %v861, %v1197
    %v1214 = vsel %vm494, %v862, %v1198
    %v1215 = vmul.f32 %v1199, 1.442695
    %v1216 = vpow.pop %v1215
    %v1217 = vmul.f32 %v1200, 1.442695
    %v1218 = vpow.pop %v1217
    %v1219 = vmul.f32 %v1201, 1.442695
    %v1220 = vpow.pop %v1219
    %v1221 = vmul.f32 %v1202, 1.442695
    %v1222 = vpow.pop %v1221
    %v1223 = vmul.f32 %v1203, 1.442695
    %v1224 = vpow.pop %v1223
    %v1225 = vmul.f32 %v1204, 1.442695
    %v1226 = vpow.pop %v1225
    %v1227 = vmul.f32 %v1205, 1.442695
    %v1228 = vpow.pop %v1227
    %v1229 = vmul.f32 %v1206, 1.442695
    %v1230 = vpow.pop %v1229
    %v1231 = vmul.f32 %v1207, 1.442695
    %v1232 = vpow.pop %v1231
    %v1233 = vmul.f32 %v1208, 1.442695
    %v1234 = vpow.pop %v1233
    %v1235 = vmul.f32 %v1209, 1.442695
    %v1236 = vpow.pop %v1235
    %v1237 = vmul.f32 %v1210, 1.442695
    %v1238 = vpow.pop %v1237
    %v1239 = vmul.f32 %v1211, 1.442695
    %v1240 = vpow.pop %v1239
    %v1241 = vmul.f32 %v1212, 1.442695
    %v1242 = vpow.pop %v1241
    %v1243 = vmul.f32 %v1213, 1.442695
    %v1244 = vpow.pop %v1243
    %v1245 = vmul.f32 %v1214, 1.442695
    %v1246 = vpow.pop %v1245
    %v1247 = vmul.f32 %v1199, %v1216
    %v1248 = vmul.f32 %v1200, %v1218
    %v1249 = vmul.f32 %v1201, %v1220
    %v1250 = vmul.f32 %v1202, %v1222
    %v1251 = vmul.f32 %v1203, %v1224
    %v1252 = vmul.f32 %v1204, %v1226
    %v1253 = vmul.f32 %v1205, %v1228
    %v1254 = vmul.f32 %v1206, %v1230
    %v1255 = vmul.f32 %v1207, %v1232
    %v1256 = vmul.f32 %v1208, %v1234
    %v1257 = vmul.f32 %v1209, %v1236
    %v1258 = vmul.f32 %v1210, %v1238
    %v1259 = vmul.f32 %v1211, %v1240
    %v1260 = vmul.f32 %v1212, %v1242
    %v1261 = vmul.f32 %v1213, %v1244
    %v1262 = vmul.f32 %v1214, %v1246
    %v1263 = vsub.f32 %v1247, %v415
    %v1264 = vsub.f32 %v1248, %v416
    %v1265 = vsub.f32 %v1249, %v417
    %v1266 = vsub.f32 %v1250, %v418
    %v1267 = vsub.f32 %v1251, %v419
    %v1268 = vsub.f32 %v1252, %v420
    %v1269 = vsub.f32 %v1253, %v421
    %v1270 = vsub.f32 %v1254, %v422
    %v1271 = vsub.f32 %v1255, %v423
    %v1272 = vsub.f32 %v1256, %v424
    %v1273 = vsub.f32 %v1257, %v425
    %v1274 = vsub.f32 %v1258, %v426
    %v1275 = vsub.f32 %v1259, %v427
    %v1276 = vsub.f32 %v1260, %v428
    %v1277 = vsub.f32 %v1261, %v429
    %v1278 = vsub.f32 %v1262, %v430
    %v1279 = vadd.f32 %v1199, 1.0
    %v1280 = vadd.f32 %v1200, 1.0
    %v1281 = vadd.f32 %v1201, 1.0
    %v1282 = vadd.f32 %v1202, 1.0
    %v1283 = vadd.f32 %v1203, 1.0
    %v1284 = vadd.f32 %v1204, 1.0
    %v1285 = vadd.f32 %v1205, 1.0
    %v1286 = vadd.f32 %v1206, 1.0
    %v1287 = vadd.f32 %v1207, 1.0
    %v1288 = vadd.f32 %v1208, 1.0
    %v1289 = vadd.f32 %v1209, 1.0
    %v1290 = vadd.f32 %v1210, 1.0
    %v1291 = vadd.f32 %v1211, 1.0
    %v1292 = vadd.f32 %v1212, 1.0
    %v1293 = vadd.f32 %v1213, 1.0
    %v1294 = vadd.f32 %v1214, 1.0
    %v1295 = vmul.f32 %v1279, 2.0
    %v1296 = vmul.f32 %v1280, 2.0
    %v1297 = vmul.f32 %v1281, 2.0
    %v1298 = vmul.f32 %v1282, 2.0
    %v1299 = vmul.f32 %v1283, 2.0
    %v1300 = vmul.f32 %v1284, 2.0
    %v1301 = vmul.f32 %v1285, 2.0
    %v1302 = vmul.f32 %v1286, 2.0
    %v1303 = vmul.f32 %v1287, 2.0
    %v1304 = vmul.f32 %v1288, 2.0
    %v1305 = vmul.f32 %v1289, 2.0
    %v1306 = vmul.f32 %v1290, 2.0
    %v1307 = vmul.f32 %v1291, 2.0
    %v1308 = vmul.f32 %v1292, 2.0
    %v1309 = vmul.f32 %v1293, 2.0
    %v1310 = vmul.f32 %v1294, 2.0
    %v1311 = vmul.f32 %v1263, %v1295
    %v1312 = vmul.f32 %v1264, %v1296
    %v1313 = vmul.f32 %v1265, %v1297
    %v1314 = vmul.f32 %v1266, %v1298
    %v1315 = vmul.f32 %v1267, %v1299
    %v1316 = vmul.f32 %v1268, %v1300
    %v1317 = vmul.f32 %v1269, %v1301
    %v1318 = vmul.f32 %v1270, %v1302
    %v1319 = vmul.f32 %v1271, %v1303
    %v1320 = vmul.f32 %v1272, %v1304
    %v1321 = vmul.f32 %v1273, %v1305
    %v1322 = vmul.f32 %v1274, %v1306
    %v1323 = vmul.f32 %v1275, %v1307
    %v1324 = vmul.f32 %v1276, %v1308
    %v1325 = vmul.f32 %v1277, %v1309
    %v1326 = vmul.f32 %v1278, %v1310
    %v1327 = vmul.f32 %v1216, 2.0
    %v1328 = vmul.f32 %v1218, 2.0
    %v1329 = vmul.f32 %v1220, 2.0
    %v1330 = vmul.f32 %v1222, 2.0
    %v1331 = vmul.f32 %v1224, 2.0
    %v1332 = vmul.f32 %v1226, 2.0
    %v1333 = vmul.f32 %v1228, 2.0
    %v1334 = vmul.f32 %v1230, 2.0
    %v1335 = vmul.f32 %v1232, 2.0
    %v1336 = vmul.f32 %v1234, 2.0
    %v1337 = vmul.f32 %v1236, 2.0
    %v1338 = vmul.f32 %v1238, 2.0
    %v1339 = vmul.f32 %v1240, 2.0
    %v1340 = vmul.f32 %v1242, 2.0
    %v1341 = vmul.f32 %v1244, 2.0
    %v1342 = vmul.f32 %v1246, 2.0
    %v1343 = vmul.f32 %v1327, %v1279
    %v1344 = vmul.f32 %v1328, %v1280
    %v1345 = vmul.f32 %v1329, %v1281
    %v1346 = vmul.f32 %v1330, %v1282
    %v1347 = vmul.f32 %v1331, %v1283
    %v1348 = vmul.f32 %v1332, %v1284
    %v1349 = vmul.f32 %v1333, %v1285
    %v1350 = vmul.f32 %v1334, %v1286
    %v1351 = vmul.f32 %v1335, %v1287
    %v1352 = vmul.f32 %v1336, %v1288
    %v1353 = vmul.f32 %v1337, %v1289
    %v1354 = vmul.f32 %v1338, %v1290
    %v1355 = vmul.f32 %v1339, %v1291
    %v1356 = vmul.f32 %v1340, %v1292
    %v1357 = vmul.f32 %v1341, %v1293
    %v1358 = vmul.f32 %v1342, %v1294
    %v1359 = vmul.f32 %v1343, %v1279
    %v1360 = vmul.f32 %v1344, %v1280
    %v1361 = vmul.f32 %v1345, %v1281
    %v1362 = vmul.f32 %v1346, %v1282
    %v1363 = vmul.f32 %v1347, %v1283
    %v1364 = vmul.f32 %v1348, %v1284
    %v1365 = vmul.f32 %v1349, %v1285
    %v1366 = vmul.f32 %v1350, %v1286
    %v1367 = vmul.f32 %v1351, %v1287
    %v1368 = vmul.f32 %v1352, %v1288
    %v1369 = vmul.f32 %v1353, %v1289
    %v1370 = vmul.f32 %v1354, %v1290
    %v1371 = vmul.f32 %v1355, %v1291
    %v1372 = vmul.f32 %v1356, %v1292
    %v1373 = vmul.f32 %v1357, %v1293
    %v1374 = vmul.f32 %v1358, %v1294
    %v1375 = vadd.f32 %v1199, 2.0
    %v1376 = vadd.f32 %v1200, 2.0
    %v1377 = vadd.f32 %v1201, 2.0
    %v1378 = vadd.f32 %v1202, 2.0
    %v1379 = vadd.f32 %v1203, 2.0
    %v1380 = vadd.f32 %v1204, 2.0
    %v1381 = vadd.f32 %v1205, 2.0
    %v1382 = vadd.f32 %v1206, 2.0
    %v1383 = vadd.f32 %v1207, 2.0
    %v1384 = vadd.f32 %v1208, 2.0
    %v1385 = vadd.f32 %v1209, 2.0
    %v1386 = vadd.f32 %v1210, 2.0
    %v1387 = vadd.f32 %v1211, 2.0
    %v1388 = vadd.f32 %v1212, 2.0
    %v1389 = vadd.f32 %v1213, 2.0
    %v1390 = vadd.f32 %v1214, 2.0
    %v1391 = vmul.f32 %v1375, %v1263
    %v1392 = vmul.f32 %v1376, %v1264
    %v1393 = vmul.f32 %v1377, %v1265
    %v1394 = vmul.f32 %v1378, %v1266
    %v1395 = vmul.f32 %v1379, %v1267
    %v1396 = vmul.f32 %v1380, %v1268
    %v1397 = vmul.f32 %v1381, %v1269
    %v1398 = vmul.f32 %v1382, %v1270
    %v1399 = vmul.f32 %v1383, %v1271
    %v1400 = vmul.f32 %v1384, %v1272
    %v1401 = vmul.f32 %v1385, %v1273
    %v1402 = vmul.f32 %v1386, %v1274
    %v1403 = vmul.f32 %v1387, %v1275
    %v1404 = vmul.f32 %v1388, %v1276
    %v1405 = vmul.f32 %v1389, %v1277
    %v1406 = vmul.f32 %v1390, %v1278
    %v1407 = vsub.f32 %v1359, %v1391
    %v1408 = vsub.f32 %v1360, %v1392
    %v1409 = vsub.f32 %v1361, %v1393
    %v1410 = vsub.f32 %v1362, %v1394
    %v1411 = vsub.f32 %v1363, %v1395
    %v1412 = vsub.f32 %v1364, %v1396
    %v1413 = vsub.f32 %v1365, %v1397
    %v1414 = vsub.f32 %v1366, %v1398
    %v1415 = vsub.f32 %v1367, %v1399
    %v1416 = vsub.f32 %v1368, %v1400
    %v1417 = vsub.f32 %v1369, %v1401
    %v1418 = vsub.f32 %v1370, %v1402
    %v1419 = vsub.f32 %v1371, %v1403
    %v1420 = vsub.f32 %v1372, %v1404
    %v1421 = vsub.f32 %v1373, %v1405
    %v1422 = vsub.f32 %v1374, %v1406
    %v1423 = vand.u32 2147483647, %v1407
    %v1424 = vand.u32 2147483647, %v1408
    %v1425 = vand.u32 2147483647, %v1409
    %v1426 = vand.u32 2147483647, %v1410
    %v1427 = vand.u32 2147483647, %v1411
    %v1428 = vand.u32 2147483647, %v1412
    %v1429 = vand.u32 2147483647, %v1413
    %v1430 = vand.u32 2147483647, %v1414
    %v1431 = vand.u32 2147483647, %v1415
    %v1432 = vand.u32 2147483647, %v1416
    %v1433 = vand.u32 2147483647, %v1417
    %v1434 = vand.u32 2147483647, %v1418
    %v1435 = vand.u32 2147483647, %v1419
    %v1436 = vand.u32 2147483647, %v1420
    %v1437 = vand.u32 2147483647, %v1421
    %v1438 = vand.u32 2147483647, %v1422
    %vm1439 = vcmp.lt.f32.partialorder %v1423, 1e-30
    %vm1440 = vcmp.lt.f32.partialorder %v1424, 1e-30
    %vm1441 = vcmp.lt.f32.partialorder %v1425, 1e-30
    %vm1442 = vcmp.lt.f32.partialorder %v1426, 1e-30
    %vm1443 = vcmp.lt.f32.partialorder %v1427, 1e-30
    %vm1444 = vcmp.lt.f32.partialorder %v1428, 1e-30
    %vm1445 = vcmp.lt.f32.partialorder %v1429, 1e-30
    %vm1446 = vcmp.lt.f32.partialorder %v1430, 1e-30
    %vm1447 = vcmp.lt.f32.partialorder %v1431, 1e-30
    %vm1448 = vcmp.lt.f32.partialorder %v1432, 1e-30
    %vm1449 = vcmp.lt.f32.partialorder %v1433, 1e-30
    %vm1450 = vcmp.lt.f32.partialorder %v1434, 1e-30
    %vm1451 = vcmp.lt.f32.partialorder %v1435, 1e-30
    %vm1452 = vcmp.lt.f32.partialorder %v1436, 1e-30
    %vm1453 = vcmp.lt.f32.partialorder %v1437, 1e-30
    %vm1454 = vcmp.lt.f32.partialorder %v1438, 1e-30
    %vm1455 = vcmp.lt.f32.partialorder %v1407, 0.0
    %vm1456 = vcmp.lt.f32.partialorder %v1408, 0.0
    %vm1457 = vcmp.lt.f32.partialorder %v1409, 0.0
    %vm1458 = vcmp.lt.f32.partialorder %v1410, 0.0
    %vm1459 = vcmp.lt.f32.partialorder %v1411, 0.0
    %vm1460 = vcmp.lt.f32.partialorder %v1412, 0.0
    %vm1461 = vcmp.lt.f32.partialorder %v1413, 0.0
    %vm1462 = vcmp.lt.f32.partialorder %v1414, 0.0
    %vm1463 = vcmp.lt.f32.partialorder %v1415, 0.0
    %vm1464 = vcmp.lt.f32.partialorder %v1416, 0.0
    %vm1465 = vcmp.lt.f32.partialorder %v1417, 0.0
    %vm1466 = vcmp.lt.f32.partialorder %v1418, 0.0
    %vm1467 = vcmp.lt.f32.partialorder %v1419, 0.0
    %vm1468 = vcmp.lt.f32.partialorder %v1420, 0.0
    %vm1469 = vcmp.lt.f32.partialorder %v1421, 0.0
    %vm1470 = vcmp.lt.f32.partialorder %v1422, 0.0
    %v1471 = vsel %vm1455, -1e-30, 1e-30
    %v1472 = vsel %vm1456, -1e-30, 1e-30
    %v1473 = vsel %vm1457, -1e-30, 1e-30
    %v1474 = vsel %vm1458, -1e-30, 1e-30
    %v1475 = vsel %vm1459, -1e-30, 1e-30
    %v1476 = vsel %vm1460, -1e-30, 1e-30
    %v1477 = vsel %vm1461, -1e-30, 1e-30
    %v1478 = vsel %vm1462, -1e-30, 1e-30
    %v1479 = vsel %vm1463, -1e-30, 1e-30
    %v1480 = vsel %vm1464, -1e-30, 1e-30
    %v1481 = vsel %vm1465, -1e-30, 1e-30
    %v1482 = vsel %vm1466, -1e-30, 1e-30
    %v1483 = vsel %vm1467, -1e-30, 1e-30
    %v1484 = vsel %vm1468, -1e-30, 1e-30
    %v1485 = vsel %vm1469, -1e-30, 1e-30
    %v1486 = vsel %vm1470, -1e-30, 1e-30
    %v1487 = vsel %vm1439, %v1471, %v1407
    %v1488 = vsel %vm1440, %v1472, %v1408
    %v1489 = vsel %vm1441, %v1473, %v1409
    %v1490 = vsel %vm1442, %v1474, %v1410
    %v1491 = vsel %vm1443, %v1475, %v1411
    %v1492 = vsel %vm1444, %v1476, %v1412
    %v1493 = vsel %vm1445, %v1477, %v1413
    %v1494 = vsel %vm1446, %v1478, %v1414
    %v1495 = vsel %vm1447, %v1479, %v1415
    %v1496 = vsel %vm1448, %v1480, %v1416
    %v1497 = vsel %vm1449, %v1481, %v1417
    %v1498 = vsel %vm1450, %v1482, %v1418
    %v1499 = vsel %vm1451, %v1483, %v1419
    %v1500 = vsel %vm1452, %v1484, %v1420
    %v1501 = vsel %vm1453, %v1485, %v1421
    %v1502 = vsel %vm1454, %v1486, %v1422
    %v1503 = vrcp.pop %v1487
    %v1504 = vrcp.pop %v1488
    %v1505 = vrcp.pop %v1489
    %v1506 = vrcp.pop %v1490
    %v1507 = vrcp.pop %v1491
    %v1508 = vrcp.pop %v1492
    %v1509 = vrcp.pop %v1493
    %v1510 = vrcp.pop %v1494
    %v1511 = vrcp.pop %v1495
    %v1512 = vrcp.pop %v1496
    %v1513 = vrcp.pop %v1497
    %v1514 = vrcp.pop %v1498
    %v1515 = vrcp.pop %v1499
    %v1516 = vrcp.pop %v1500
    %v1517 = vrcp.pop %v1501
    %v1518 = vrcp.pop %v1502
    %v1519 = vmul.f32 %v1311, %v1503
    %v1520 = vmul.f32 %v1312, %v1504
    %v1521 = vmul.f32 %v1313, %v1505
    %v1522 = vmul.f32 %v1314, %v1506
    %v1523 = vmul.f32 %v1315, %v1507
    %v1524 = vmul.f32 %v1316, %v1508
    %v1525 = vmul.f32 %v1317, %v1509
    %v1526 = vmul.f32 %v1318, %v1510
    %v1527 = vmul.f32 %v1319, %v1511
    %v1528 = vmul.f32 %v1320, %v1512
    %v1529 = vmul.f32 %v1321, %v1513
    %v1530 = vmul.f32 %v1322, %v1514
    %v1531 = vmul.f32 %v1323, %v1515
    %v1532 = vmul.f32 %v1324, %v1516
    %v1533 = vmul.f32 %v1325, %v1517
    %v1534 = vmul.f32 %v1326, %v1518
    %v1535 = vsub.f32 %v1199, %v1519
    %v1536 = vsub.f32 %v1200, %v1520
    %v1537 = vsub.f32 %v1201, %v1521
    %v1538 = vsub.f32 %v1202, %v1522
    %v1539 = vsub.f32 %v1203, %v1523
    %v1540 = vsub.f32 %v1204, %v1524
    %v1541 = vsub.f32 %v1205, %v1525
    %v1542 = vsub.f32 %v1206, %v1526
    %v1543 = vsub.f32 %v1207, %v1527
    %v1544 = vsub.f32 %v1208, %v1528
    %v1545 = vsub.f32 %v1209, %v1529
    %v1546 = vsub.f32 %v1210, %v1530
    %v1547 = vsub.f32 %v1211, %v1531
    %v1548 = vsub.f32 %v1212, %v1532
    %v1549 = vsub.f32 %v1213, %v1533
    %v1550 = vsub.f32 %v1214, %v1534
    %v1551 = vsel %vm479, %v847, %v1535
    %v1552 = vsel %vm480, %v848, %v1536
    %v1553 = vsel %vm481, %v849, %v1537
    %v1554 = vsel %vm482, %v850, %v1538
    %v1555 = vsel %vm483, %v851, %v1539
    %v1556 = vsel %vm484, %v852, %v1540
    %v1557 = vsel %vm485, %v853, %v1541
    %v1558 = vsel %vm486, %v854, %v1542
    %v1559 = vsel %vm487, %v855, %v1543
    %v1560 = vsel %vm488, %v856, %v1544
    %v1561 = vsel %vm489, %v857, %v1545
    %v1562 = vsel %vm490, %v858, %v1546
    %v1563 = vsel %vm491, %v859, %v1547
    %v1564 = vsel %vm492, %v860, %v1548
    %v1565 = vsel %vm493, %v861, %v1549
    %v1566 = vsel %vm494, %v862, %v1550
    %v1567 = vmul.f32 %v1551, 1.442695
    %v1568 = vpow.pop %v1567
    %v1569 = vmul.f32 %v1552, 1.442695
    %v1570 = vpow.pop %v1569
    %v1571 = vmul.f32 %v1553, 1.442695
    %v1572 = vpow.pop %v1571
    %v1573 = vmul.f32 %v1554, 1.442695
    %v1574 = vpow.pop %v1573
    %v1575 = vmul.f32 %v1555, 1.442695
    %v1576 = vpow.pop %v1575
    %v1577 = vmul.f32 %v1556, 1.442695
    %v1578 = vpow.pop %v1577
    %v1579 = vmul.f32 %v1557, 1.442695
    %v1580 = vpow.pop %v1579
    %v1581 = vmul.f32 %v1558, 1.442695
    %v1582 = vpow.pop %v1581
    %v1583 = vmul.f32 %v1559, 1.442695
    %v1584 = vpow.pop %v1583
    %v1585 = vmul.f32 %v1560, 1.442695
    %v1586 = vpow.pop %v1585
    %v1587 = vmul.f32 %v1561, 1.442695
    %v1588 = vpow.pop %v1587
    %v1589 = vmul.f32 %v1562, 1.442695
    %v1590 = vpow.pop %v1589
    %v1591 = vmul.f32 %v1563, 1.442695
    %v1592 = vpow.pop %v1591
    %v1593 = vmul.f32 %v1564, 1.442695
    %v1594 = vpow.pop %v1593
    %v1595 = vmul.f32 %v1565, 1.442695
    %v1596 = vpow.pop %v1595
    %v1597 = vmul.f32 %v1566, 1.442695
    %v1598 = vpow.pop %v1597
    %v1599 = vmul.f32 %v1551, %v1568
    %v1600 = vmul.f32 %v1552, %v1570
    %v1601 = vmul.f32 %v1553, %v1572
    %v1602 = vmul.f32 %v1554, %v1574
    %v1603 = vmul.f32 %v1555, %v1576
    %v1604 = vmul.f32 %v1556, %v1578
    %v1605 = vmul.f32 %v1557, %v1580
    %v1606 = vmul.f32 %v1558, %v1582
    %v1607 = vmul.f32 %v1559, %v1584
    %v1608 = vmul.f32 %v1560, %v1586
    %v1609 = vmul.f32 %v1561, %v1588
    %v1610 = vmul.f32 %v1562, %v1590
    %v1611 = vmul.f32 %v1563, %v1592
    %v1612 = vmul.f32 %v1564, %v1594
    %v1613 = vmul.f32 %v1565, %v1596
    %v1614 = vmul.f32 %v1566, %v1598
    %v1615 = vsub.f32 %v1599, %v415
    %v1616 = vsub.f32 %v1600, %v416
    %v1617 = vsub.f32 %v1601, %v417
    %v1618 = vsub.f32 %v1602, %v418
    %v1619 = vsub.f32 %v1603, %v419
    %v1620 = vsub.f32 %v1604, %v420
    %v1621 = vsub.f32 %v1605, %v421
    %v1622 = vsub.f32 %v1606, %v422
    %v1623 = vsub.f32 %v1607, %v423
    %v1624 = vsub.f32 %v1608, %v424
    %v1625 = vsub.f32 %v1609, %v425
    %v1626 = vsub.f32 %v1610, %v426
    %v1627 = vsub.f32 %v1611, %v427
    %v1628 = vsub.f32 %v1612, %v428
    %v1629 = vsub.f32 %v1613, %v429
    %v1630 = vsub.f32 %v1614, %v430
    %v1631 = vadd.f32 %v1551, 1.0
    %v1632 = vadd.f32 %v1552, 1.0
    %v1633 = vadd.f32 %v1553, 1.0
    %v1634 = vadd.f32 %v1554, 1.0
    %v1635 = vadd.f32 %v1555, 1.0
    %v1636 = vadd.f32 %v1556, 1.0
    %v1637 = vadd.f32 %v1557, 1.0
    %v1638 = vadd.f32 %v1558, 1.0
    %v1639 = vadd.f32 %v1559, 1.0
    %v1640 = vadd.f32 %v1560, 1.0
    %v1641 = vadd.f32 %v1561, 1.0
    %v1642 = vadd.f32 %v1562, 1.0
    %v1643 = vadd.f32 %v1563, 1.0
    %v1644 = vadd.f32 %v1564, 1.0
    %v1645 = vadd.f32 %v1565, 1.0
    %v1646 = vadd.f32 %v1566, 1.0
    %v1647 = vmul.f32 %v1631, 2.0
    %v1648 = vmul.f32 %v1632, 2.0
    %v1649 = vmul.f32 %v1633, 2.0
    %v1650 = vmul.f32 %v1634, 2.0
    %v1651 = vmul.f32 %v1635, 2.0
    %v1652 = vmul.f32 %v1636, 2.0
    %v1653 = vmul.f32 %v1637, 2.0
    %v1654 = vmul.f32 %v1638, 2.0
    %v1655 = vmul.f32 %v1639, 2.0
    %v1656 = vmul.f32 %v1640, 2.0
    %v1657 = vmul.f32 %v1641, 2.0
    %v1658 = vmul.f32 %v1642, 2.0
    %v1659 = vmul.f32 %v1643, 2.0
    %v1660 = vmul.f32 %v1644, 2.0
    %v1661 = vmul.f32 %v1645, 2.0
    %v1662 = vmul.f32 %v1646, 2.0
    %v1663 = vmul.f32 %v1615, %v1647
    %v1664 = vmul.f32 %v1616, %v1648
    %v1665 = vmul.f32 %v1617, %v1649
    %v1666 = vmul.f32 %v1618, %v1650
    %v1667 = vmul.f32 %v1619, %v1651
    %v1668 = vmul.f32 %v1620, %v1652
    %v1669 = vmul.f32 %v1621, %v1653
    %v1670 = vmul.f32 %v1622, %v1654
    %v1671 = vmul.f32 %v1623, %v1655
    %v1672 = vmul.f32 %v1624, %v1656
    %v1673 = vmul.f32 %v1625, %v1657
    %v1674 = vmul.f32 %v1626, %v1658
    %v1675 = vmul.f32 %v1627, %v1659
    %v1676 = vmul.f32 %v1628, %v1660
    %v1677 = vmul.f32 %v1629, %v1661
    %v1678 = vmul.f32 %v1630, %v1662
    %v1679 = vmul.f32 %v1568, 2.0
    %v1680 = vmul.f32 %v1570, 2.0
    %v1681 = vmul.f32 %v1572, 2.0
    %v1682 = vmul.f32 %v1574, 2.0
    %v1683 = vmul.f32 %v1576, 2.0
    %v1684 = vmul.f32 %v1578, 2.0
    %v1685 = vmul.f32 %v1580, 2.0
    %v1686 = vmul.f32 %v1582, 2.0
    %v1687 = vmul.f32 %v1584, 2.0
    %v1688 = vmul.f32 %v1586, 2.0
    %v1689 = vmul.f32 %v1588, 2.0
    %v1690 = vmul.f32 %v1590, 2.0
    %v1691 = vmul.f32 %v1592, 2.0
    %v1692 = vmul.f32 %v1594, 2.0
    %v1693 = vmul.f32 %v1596, 2.0
    %v1694 = vmul.f32 %v1598, 2.0
    %v1695 = vmul.f32 %v1679, %v1631
    %v1696 = vmul.f32 %v1680, %v1632
    %v1697 = vmul.f32 %v1681, %v1633
    %v1698 = vmul.f32 %v1682, %v1634
    %v1699 = vmul.f32 %v1683, %v1635
    %v1700 = vmul.f32 %v1684, %v1636
    %v1701 = vmul.f32 %v1685, %v1637
    %v1702 = vmul.f32 %v1686, %v1638
    %v1703 = vmul.f32 %v1687, %v1639
    %v1704 = vmul.f32 %v1688, %v1640
    %v1705 = vmul.f32 %v1689, %v1641
    %v1706 = vmul.f32 %v1690, %v1642
    %v1707 = vmul.f32 %v1691, %v1643
    %v1708 = vmul.f32 %v1692, %v1644
    %v1709 = vmul.f32 %v1693, %v1645
    %v1710 = vmul.f32 %v1694, %v1646
    %v1711 = vmul.f32 %v1695, %v1631
    %v1712 = vmul.f32 %v1696, %v1632
    %v1713 = vmul.f32 %v1697, %v1633
    %v1714 = vmul.f32 %v1698, %v1634
    %v1715 = vmul.f32 %v1699, %v1635
    %v1716 = vmul.f32 %v1700, %v1636
    %v1717 = vmul.f32 %v1701, %v1637
    %v1718 = vmul.f32 %v1702, %v1638
    %v1719 = vmul.f32 %v1703, %v1639
    %v1720 = vmul.f32 %v1704, %v1640
    %v1721 = vmul.f32 %v1705, %v1641
    %v1722 = vmul.f32 %v1706, %v1642
    %v1723 = vmul.f32 %v1707, %v1643
    %v1724 = vmul.f32 %v1708, %v1644
    %v1725 = vmul.f32 %v1709, %v1645
    %v1726 = vmul.f32 %v1710, %v1646
    %v1727 = vadd.f32 %v1551, 2.0
    %v1728 = vadd.f32 %v1552, 2.0
    %v1729 = vadd.f32 %v1553, 2.0
    %v1730 = vadd.f32 %v1554, 2.0
    %v1731 = vadd.f32 %v1555, 2.0
    %v1732 = vadd.f32 %v1556, 2.0
    %v1733 = vadd.f32 %v1557, 2.0
    %v1734 = vadd.f32 %v1558, 2.0
    %v1735 = vadd.f32 %v1559, 2.0
    %v1736 = vadd.f32 %v1560, 2.0
    %v1737 = vadd.f32 %v1561, 2.0
    %v1738 = vadd.f32 %v1562, 2.0
    %v1739 = vadd.f32 %v1563, 2.0
    %v1740 = vadd.f32 %v1564, 2.0
    %v1741 = vadd.f32 %v1565, 2.0
    %v1742 = vadd.f32 %v1566, 2.0
    %v1743 = vmul.f32 %v1727, %v1615
    %v1744 = vmul.f32 %v1728, %v1616
    %v1745 = vmul.f32 %v1729, %v1617
    %v1746 = vmul.f32 %v1730, %v1618
    %v1747 = vmul.f32 %v1731, %v1619
    %v1748 = vmul.f32 %v1732, %v1620
    %v1749 = vmul.f32 %v1733, %v1621
    %v1750 = vmul.f32 %v1734, %v1622
    %v1751 = vmul.f32 %v1735, %v1623
    %v1752 = vmul.f32 %v1736, %v1624
    %v1753 = vmul.f32 %v1737, %v1625
    %v1754 = vmul.f32 %v1738, %v1626
    %v1755 = vmul.f32 %v1739, %v1627
    %v1756 = vmul.f32 %v1740, %v1628
    %v1757 = vmul.f32 %v1741, %v1629
    %v1758 = vmul.f32 %v1742, %v1630
    %v1759 = vsub.f32 %v1711, %v1743
    %v1760 = vsub.f32 %v1712, %v1744
    %v1761 = vsub.f32 %v1713, %v1745
    %v1762 = vsub.f32 %v1714, %v1746
    %v1763 = vsub.f32 %v1715, %v1747
    %v1764 = vsub.f32 %v1716, %v1748
    %v1765 = vsub.f32 %v1717, %v1749
    %v1766 = vsub.f32 %v1718, %v1750
    %v1767 = vsub.f32 %v1719, %v1751
    %v1768 = vsub.f32 %v1720, %v1752
    %v1769 = vsub.f32 %v1721, %v1753
    %v1770 = vsub.f32 %v1722, %v1754
    %v1771 = vsub.f32 %v1723, %v1755
    %v1772 = vsub.f32 %v1724, %v1756
    %v1773 = vsub.f32 %v1725, %v1757
    %v1774 = vsub.f32 %v1726, %v1758
    %v1775 = vand.u32 2147483647, %v1759
    %v1776 = vand.u32 2147483647, %v1760
    %v1777 = vand.u32 2147483647, %v1761
    %v1778 = vand.u32 2147483647, %v1762
    %v1779 = vand.u32 2147483647, %v1763
    %v1780 = vand.u32 2147483647, %v1764
    %v1781 = vand.u32 2147483647, %v1765
    %v1782 = vand.u32 2147483647, %v1766
    %v1783 = vand.u32 2147483647, %v1767
    %v1784 = vand.u32 2147483647, %v1768
    %v1785 = vand.u32 2147483647, %v1769
    %v1786 = vand.u32 2147483647, %v1770
    %v1787 = vand.u32 2147483647, %v1771
    %v1788 = vand.u32 2147483647, %v1772
    %v1789 = vand.u32 2147483647, %v1773
    %v1790 = vand.u32 2147483647, %v1774
    %vm1791 = vcmp.lt.f32.partialorder %v1775, 1e-30
    %vm1792 = vcmp.lt.f32.partialorder %v1776, 1e-30
    %vm1793 = vcmp.lt.f32.partialorder %v1777, 1e-30
    %vm1794 = vcmp.lt.f32.partialorder %v1778, 1e-30
    %vm1795 = vcmp.lt.f32.partialorder %v1779, 1e-30
    %vm1796 = vcmp.lt.f32.partialorder %v1780, 1e-30
    %vm1797 = vcmp.lt.f32.partialorder %v1781, 1e-30
    %vm1798 = vcmp.lt.f32.partialorder %v1782, 1e-30
    %vm1799 = vcmp.lt.f32.partialorder %v1783, 1e-30
    %vm1800 = vcmp.lt.f32.partialorder %v1784, 1e-30
    %vm1801 = vcmp.lt.f32.partialorder %v1785, 1e-30
    %vm1802 = vcmp.lt.f32.partialorder %v1786, 1e-30
    %vm1803 = vcmp.lt.f32.partialorder %v1787, 1e-30
    %vm1804 = vcmp.lt.f32.partialorder %v1788, 1e-30
    %vm1805 = vcmp.lt.f32.partialorder %v1789, 1e-30
    %vm1806 = vcmp.lt.f32.partialorder %v1790, 1e-30
    %vm1807 = vcmp.lt.f32.partialorder %v1759, 0.0
    %vm1808 = vcmp.lt.f32.partialorder %v1760, 0.0
    %vm1809 = vcmp.lt.f32.partialorder %v1761, 0.0
    %vm1810 = vcmp.lt.f32.partialorder %v1762, 0.0
    %vm1811 = vcmp.lt.f32.partialorder %v1763, 0.0
    %vm1812 = vcmp.lt.f32.partialorder %v1764, 0.0
    %vm1813 = vcmp.lt.f32.partialorder %v1765, 0.0
    %vm1814 = vcmp.lt.f32.partialorder %v1766, 0.0
    %vm1815 = vcmp.lt.f32.partialorder %v1767, 0.0
    %vm1816 = vcmp.lt.f32.partialorder %v1768, 0.0
    %vm1817 = vcmp.lt.f32.partialorder %v1769, 0.0
    %vm1818 = vcmp.lt.f32.partialorder %v1770, 0.0
    %vm1819 = vcmp.lt.f32.partialorder %v1771, 0.0
    %vm1820 = vcmp.lt.f32.partialorder %v1772, 0.0
    %vm1821 = vcmp.lt.f32.partialorder %v1773, 0.0
    %vm1822 = vcmp.lt.f32.partialorder %v1774, 0.0
    %v1823 = vsel %vm1807, -1e-30, 1e-30
    %v1824 = vsel %vm1808, -1e-30, 1e-30
    %v1825 = vsel %vm1809, -1e-30, 1e-30
    %v1826 = vsel %vm1810, -1e-30, 1e-30
    %v1827 = vsel %vm1811, -1e-30, 1e-30
    %v1828 = vsel %vm1812, -1e-30, 1e-30
    %v1829 = vsel %vm1813, -1e-30, 1e-30
    %v1830 = vsel %vm1814, -1e-30, 1e-30
    %v1831 = vsel %vm1815, -1e-30, 1e-30
    %v1832 = vsel %vm1816, -1e-30, 1e-30
    %v1833 = vsel %vm1817, -1e-30, 1e-30
    %v1834 = vsel %vm1818, -1e-30, 1e-30
    %v1835 = vsel %vm1819, -1e-30, 1e-30
    %v1836 = vsel %vm1820, -1e-30, 1e-30
    %v1837 = vsel %vm1821, -1e-30, 1e-30
    %v1838 = vsel %vm1822, -1e-30, 1e-30
    %v1839 = vsel %vm1791, %v1823, %v1759
    %v1840 = vsel %vm1792, %v1824, %v1760
    %v1841 = vsel %vm1793, %v1825, %v1761
    %v1842 = vsel %vm1794, %v1826, %v1762
    %v1843 = vsel %vm1795, %v1827, %v1763
    %v1844 = vsel %vm1796, %v1828, %v1764
    %v1845 = vsel %vm1797, %v1829, %v1765
    %v1846 = vsel %vm1798, %v1830, %v1766
    %v1847 = vsel %vm1799, %v1831, %v1767
    %v1848 = vsel %vm1800, %v1832, %v1768
    %v1849 = vsel %vm1801, %v1833, %v1769
    %v1850 = vsel %vm1802, %v1834, %v1770
    %v1851 = vsel %vm1803, %v1835, %v1771
    %v1852 = vsel %vm1804, %v1836, %v1772
    %v1853 = vsel %vm1805, %v1837, %v1773
    %v1854 = vsel %vm1806, %v1838, %v1774
    %v1855 = vrcp.pop %v1839
    %v1856 = vrcp.pop %v1840
    %v1857 = vrcp.pop %v1841
    %v1858 = vrcp.pop %v1842
    %v1859 = vrcp.pop %v1843
    %v1860 = vrcp.pop %v1844
    %v1861 = vrcp.pop %v1845
    %v1862 = vrcp.pop %v1846
    %v1863 = vrcp.pop %v1847
    %v1864 = vrcp.pop %v1848
    %v1865 = vrcp.pop %v1849
    %v1866 = vrcp.pop %v1850
    %v1867 = vrcp.pop %v1851
    %v1868 = vrcp.pop %v1852
    %v1869 = vrcp.pop %v1853
    %v1870 = vrcp.pop %v1854
    %v1871 = vmul.f32 %v1663, %v1855
    %v1872 = vmul.f32 %v1664, %v1856
    %v1873 = vmul.f32 %v1665, %v1857
    %v1874 = vmul.f32 %v1666, %v1858
    %v1875 = vmul.f32 %v1667, %v1859
    %v1876 = vmul.f32 %v1668, %v1860
    %v1877 = vmul.f32 %v1669, %v1861
    %v1878 = vmul.f32 %v1670, %v1862
    %v1879 = vmul.f32 %v1671, %v1863
    %v1880 = vmul.f32 %v1672, %v1864
    %v1881 = vmul.f32 %v1673, %v1865
    %v1882 = vmul.f32 %v1674, %v1866
    %v1883 = vmul.f32 %v1675, %v1867
    %v1884 = vmul.f32 %v1676, %v1868
    %v1885 = vmul.f32 %v1677, %v1869
    %v1886 = vmul.f32 %v1678, %v1870
    %v1887 = vsub.f32 %v1551, %v1871
    %v1888 = vsub.f32 %v1552, %v1872
    %v1889 = vsub.f32 %v1553, %v1873
    %v1890 = vsub.f32 %v1554, %v1874
    %v1891 = vsub.f32 %v1555, %v1875
    %v1892 = vsub.f32 %v1556, %v1876
    %v1893 = vsub.f32 %v1557, %v1877
    %v1894 = vsub.f32 %v1558, %v1878
    %v1895 = vsub.f32 %v1559, %v1879
    %v1896 = vsub.f32 %v1560, %v1880
    %v1897 = vsub.f32 %v1561, %v1881
    %v1898 = vsub.f32 %v1562, %v1882
    %v1899 = vsub.f32 %v1563, %v1883
    %v1900 = vsub.f32 %v1564, %v1884
    %v1901 = vsub.f32 %v1565, %v1885
    %v1902 = vsub.f32 %v1566, %v1886
    %v1903 = vsel %vm479, %v847, %v1887
    %v1904 = vsel %vm480, %v848, %v1888
    %v1905 = vsel %vm481, %v849, %v1889
    %v1906 = vsel %vm482, %v850, %v1890
    %v1907 = vsel %vm483, %v851, %v1891
    %v1908 = vsel %vm484, %v852, %v1892
    %v1909 = vsel %vm485, %v853, %v1893
    %v1910 = vsel %vm486, %v854, %v1894
    %v1911 = vsel %vm487, %v855, %v1895
    %v1912 = vsel %vm488, %v856, %v1896
    %v1913 = vsel %vm489, %v857, %v1897
    %v1914 = vsel %vm490, %v858, %v1898
    %v1915 = vsel %vm491, %v859, %v1899
    %v1916 = vsel %vm492, %v860, %v1900
    %v1917 = vsel %vm493, %v861, %v1901
    %v1918 = vsel %vm494, %v862, %v1902
    %v1919 = vmul.f32 %v1903, 1.442695
    %v1920 = vpow.pop %v1919
    %v1921 = vmul.f32 %v1904, 1.442695
    %v1922 = vpow.pop %v1921
    %v1923 = vmul.f32 %v1905, 1.442695
    %v1924 = vpow.pop %v1923
    %v1925 = vmul.f32 %v1906, 1.442695
    %v1926 = vpow.pop %v1925
    %v1927 = vmul.f32 %v1907, 1.442695
    %v1928 = vpow.pop %v1927
    %v1929 = vmul.f32 %v1908, 1.442695
    %v1930 = vpow.pop %v1929
    %v1931 = vmul.f32 %v1909, 1.442695
    %v1932 = vpow.pop %v1931
    %v1933 = vmul.f32 %v1910, 1.442695
    %v1934 = vpow.pop %v1933
    %v1935 = vmul.f32 %v1911, 1.442695
    %v1936 = vpow.pop %v1935
    %v1937 = vmul.f32 %v1912, 1.442695
    %v1938 = vpow.pop %v1937
    %v1939 = vmul.f32 %v1913, 1.442695
    %v1940 = vpow.pop %v1939
    %v1941 = vmul.f32 %v1914, 1.442695
    %v1942 = vpow.pop %v1941
    %v1943 = vmul.f32 %v1915, 1.442695
    %v1944 = vpow.pop %v1943
    %v1945 = vmul.f32 %v1916, 1.442695
    %v1946 = vpow.pop %v1945
    %v1947 = vmul.f32 %v1917, 1.442695
    %v1948 = vpow.pop %v1947
    %v1949 = vmul.f32 %v1918, 1.442695
    %v1950 = vpow.pop %v1949
    %v1951 = vmul.f32 %v1903, %v1920
    %v1952 = vmul.f32 %v1904, %v1922
    %v1953 = vmul.f32 %v1905, %v1924
    %v1954 = vmul.f32 %v1906, %v1926
    %v1955 = vmul.f32 %v1907, %v1928
    %v1956 = vmul.f32 %v1908, %v1930
    %v1957 = vmul.f32 %v1909, %v1932
    %v1958 = vmul.f32 %v1910, %v1934
    %v1959 = vmul.f32 %v1911, %v1936
    %v1960 = vmul.f32 %v1912, %v1938
    %v1961 = vmul.f32 %v1913, %v1940
    %v1962 = vmul.f32 %v1914, %v1942
    %v1963 = vmul.f32 %v1915, %v1944
    %v1964 = vmul.f32 %v1916, %v1946
    %v1965 = vmul.f32 %v1917, %v1948
    %v1966 = vmul.f32 %v1918, %v1950
    %v1967 = vsub.f32 %v1951, %v415
    %v1968 = vsub.f32 %v1952, %v416
    %v1969 = vsub.f32 %v1953, %v417
    %v1970 = vsub.f32 %v1954, %v418
    %v1971 = vsub.f32 %v1955, %v419
    %v1972 = vsub.f32 %v1956, %v420
    %v1973 = vsub.f32 %v1957, %v421
    %v1974 = vsub.f32 %v1958, %v422
    %v1975 = vsub.f32 %v1959, %v423
    %v1976 = vsub.f32 %v1960, %v424
    %v1977 = vsub.f32 %v1961, %v425
    %v1978 = vsub.f32 %v1962, %v426
    %v1979 = vsub.f32 %v1963, %v427
    %v1980 = vsub.f32 %v1964, %v428
    %v1981 = vsub.f32 %v1965, %v429
    %v1982 = vsub.f32 %v1966, %v430
    %v1983 = vadd.f32 %v1903, 1.0
    %v1984 = vadd.f32 %v1904, 1.0
    %v1985 = vadd.f32 %v1905, 1.0
    %v1986 = vadd.f32 %v1906, 1.0
    %v1987 = vadd.f32 %v1907, 1.0
    %v1988 = vadd.f32 %v1908, 1.0
    %v1989 = vadd.f32 %v1909, 1.0
    %v1990 = vadd.f32 %v1910, 1.0
    %v1991 = vadd.f32 %v1911, 1.0
    %v1992 = vadd.f32 %v1912, 1.0
    %v1993 = vadd.f32 %v1913, 1.0
    %v1994 = vadd.f32 %v1914, 1.0
    %v1995 = vadd.f32 %v1915, 1.0
    %v1996 = vadd.f32 %v1916, 1.0
    %v1997 = vadd.f32 %v1917, 1.0
    %v1998 = vadd.f32 %v1918, 1.0
    %v1999 = vmul.f32 %v1983, 2.0
    %v2000 = vmul.f32 %v1984, 2.0
    %v2001 = vmul.f32 %v1985, 2.0
    %v2002 = vmul.f32 %v1986, 2.0
    %v2003 = vmul.f32 %v1987, 2.0
    %v2004 = vmul.f32 %v1988, 2.0
    %v2005 = vmul.f32 %v1989, 2.0
    %v2006 = vmul.f32 %v1990, 2.0
    %v2007 = vmul.f32 %v1991, 2.0
    %v2008 = vmul.f32 %v1992, 2.0
    %v2009 = vmul.f32 %v1993, 2.0
    %v2010 = vmul.f32 %v1994, 2.0
    %v2011 = vmul.f32 %v1995, 2.0
    %v2012 = vmul.f32 %v1996, 2.0
    %v2013 = vmul.f32 %v1997, 2.0
    %v2014 = vmul.f32 %v1998, 2.0
    %v2015 = vmul.f32 %v1967, %v1999
    %v2016 = vmul.f32 %v1968, %v2000
    %v2017 = vmul.f32 %v1969, %v2001
    %v2018 = vmul.f32 %v1970, %v2002
    %v2019 = vmul.f32 %v1971, %v2003
    %v2020 = vmul.f32 %v1972, %v2004
    %v2021 = vmul.f32 %v1973, %v2005
    %v2022 = vmul.f32 %v1974, %v2006
    %v2023 = vmul.f32 %v1975, %v2007
    %v2024 = vmul.f32 %v1976, %v2008
    %v2025 = vmul.f32 %v1977, %v2009
    %v2026 = vmul.f32 %v1978, %v2010
    %v2027 = vmul.f32 %v1979, %v2011
    %v2028 = vmul.f32 %v1980, %v2012
    %v2029 = vmul.f32 %v1981, %v2013
    %v2030 = vmul.f32 %v1982, %v2014
    %v2031 = vmul.f32 %v1920, 2.0
    %v2032 = vmul.f32 %v1922, 2.0
    %v2033 = vmul.f32 %v1924, 2.0
    %v2034 = vmul.f32 %v1926, 2.0
    %v2035 = vmul.f32 %v1928, 2.0
    %v2036 = vmul.f32 %v1930, 2.0
    %v2037 = vmul.f32 %v1932, 2.0
    %v2038 = vmul.f32 %v1934, 2.0
    %v2039 = vmul.f32 %v1936, 2.0
    %v2040 = vmul.f32 %v1938, 2.0
    %v2041 = vmul.f32 %v1940, 2.0
    %v2042 = vmul.f32 %v1942, 2.0
    %v2043 = vmul.f32 %v1944, 2.0
    %v2044 = vmul.f32 %v1946, 2.0
    %v2045 = vmul.f32 %v1948, 2.0
    %v2046 = vmul.f32 %v1950, 2.0
    %v2047 = vmul.f32 %v2031, %v1983
    %v2048 = vmul.f32 %v2032, %v1984
    %v2049 = vmul.f32 %v2033, %v1985
    %v2050 = vmul.f32 %v2034, %v1986
    %v2051 = vmul.f32 %v2035, %v1987
    %v2052 = vmul.f32 %v2036, %v1988
    %v2053 = vmul.f32 %v2037, %v1989
    %v2054 = vmul.f32 %v2038, %v1990
    %v2055 = vmul.f32 %v2039, %v1991
    %v2056 = vmul.f32 %v2040, %v1992
    %v2057 = vmul.f32 %v2041, %v1993
    %v2058 = vmul.f32 %v2042, %v1994
    %v2059 = vmul.f32 %v2043, %v1995
    %v2060 = vmul.f32 %v2044, %v1996
    %v2061 = vmul.f32 %v2045, %v1997
    %v2062 = vmul.f32 %v2046, %v1998
    %v2063 = vmul.f32 %v2047, %v1983
    %v2064 = vmul.f32 %v2048, %v1984
    %v2065 = vmul.f32 %v2049, %v1985
    %v2066 = vmul.f32 %v2050, %v1986
    %v2067 = vmul.f32 %v2051, %v1987
    %v2068 = vmul.f32 %v2052, %v1988
    %v2069 = vmul.f32 %v2053, %v1989
    %v2070 = vmul.f32 %v2054, %v1990
    %v2071 = vmul.f32 %v2055, %v1991
    %v2072 = vmul.f32 %v2056, %v1992
    %v2073 = vmul.f32 %v2057, %v1993
    %v2074 = vmul.f32 %v2058, %v1994
    %v2075 = vmul.f32 %v2059, %v1995
    %v2076 = vmul.f32 %v2060, %v1996
    %v2077 = vmul.f32 %v2061, %v1997
    %v2078 = vmul.f32 %v2062, %v1998
    %v2079 = vadd.f32 %v1903, 2.0
    %v2080 = vadd.f32 %v1904, 2.0
    %v2081 = vadd.f32 %v1905, 2.0
    %v2082 = vadd.f32 %v1906, 2.0
    %v2083 = vadd.f32 %v1907, 2.0
    %v2084 = vadd.f32 %v1908, 2.0
    %v2085 = vadd.f32 %v1909, 2.0
    %v2086 = vadd.f32 %v1910, 2.0
    %v2087 = vadd.f32 %v1911, 2.0
    %v2088 = vadd.f32 %v1912, 2.0
    %v2089 = vadd.f32 %v1913, 2.0
    %v2090 = vadd.f32 %v1914, 2.0
    %v2091 = vadd.f32 %v1915, 2.0
    %v2092 = vadd.f32 %v1916, 2.0
    %v2093 = vadd.f32 %v1917, 2.0
    %v2094 = vadd.f32 %v1918, 2.0
    %v2095 = vmul.f32 %v2079, %v1967
    %v2096 = vmul.f32 %v2080, %v1968
    %v2097 = vmul.f32 %v2081, %v1969
    %v2098 = vmul.f32 %v2082, %v1970
    %v2099 = vmul.f32 %v2083, %v1971
    %v2100 = vmul.f32 %v2084, %v1972
    %v2101 = vmul.f32 %v2085, %v1973
    %v2102 = vmul.f32 %v2086, %v1974
    %v2103 = vmul.f32 %v2087, %v1975
    %v2104 = vmul.f32 %v2088, %v1976
    %v2105 = vmul.f32 %v2089, %v1977
    %v2106 = vmul.f32 %v2090, %v1978
    %v2107 = vmul.f32 %v2091, %v1979
    %v2108 = vmul.f32 %v2092, %v1980
    %v2109 = vmul.f32 %v2093, %v1981
    %v2110 = vmul.f32 %v2094, %v1982
    %v2111 = vsub.f32 %v2063, %v2095
    %v2112 = vsub.f32 %v2064, %v2096
    %v2113 = vsub.f32 %v2065, %v2097
    %v2114 = vsub.f32 %v2066, %v2098
    %v2115 = vsub.f32 %v2067, %v2099
    %v2116 = vsub.f32 %v2068, %v2100
    %v2117 = vsub.f32 %v2069, %v2101
    %v2118 = vsub.f32 %v2070, %v2102
    %v2119 = vsub.f32 %v2071, %v2103
    %v2120 = vsub.f32 %v2072, %v2104
    %v2121 = vsub.f32 %v2073, %v2105
    %v2122 = vsub.f32 %v2074, %v2106
    %v2123 = vsub.f32 %v2075, %v2107
    %v2124 = vsub.f32 %v2076, %v2108
    %v2125 = vsub.f32 %v2077, %v2109
    %v2126 = vsub.f32 %v2078, %v2110
    %v2127 = vand.u32 2147483647, %v2111
    %v2128 = vand.u32 2147483647, %v2112
    %v2129 = vand.u32 2147483647, %v2113
    %v2130 = vand.u32 2147483647, %v2114
    %v2131 = vand.u32 2147483647, %v2115
    %v2132 = vand.u32 2147483647, %v2116
    %v2133 = vand.u32 2147483647, %v2117
    %v2134 = vand.u32 2147483647, %v2118
    %v2135 = vand.u32 2147483647, %v2119
    %v2136 = vand.u32 2147483647, %v2120
    %v2137 = vand.u32 2147483647, %v2121
    %v2138 = vand.u32 2147483647, %v2122
    %v2139 = vand.u32 2147483647, %v2123
    %v2140 = vand.u32 2147483647, %v2124
    %v2141 = vand.u32 2147483647, %v2125
    %v2142 = vand.u32 2147483647, %v2126
    %vm2143 = vcmp.lt.f32.partialorder %v2127, 1e-30
    %vm2144 = vcmp.lt.f32.partialorder %v2128, 1e-30
    %vm2145 = vcmp.lt.f32.partialorder %v2129, 1e-30
    %vm2146 = vcmp.lt.f32.partialorder %v2130, 1e-30
    %vm2147 = vcmp.lt.f32.partialorder %v2131, 1e-30
    %vm2148 = vcmp.lt.f32.partialorder %v2132, 1e-30
    %vm2149 = vcmp.lt.f32.partialorder %v2133, 1e-30
    %vm2150 = vcmp.lt.f32.partialorder %v2134, 1e-30
    %vm2151 = vcmp.lt.f32.partialorder %v2135, 1e-30
    %vm2152 = vcmp.lt.f32.partialorder %v2136, 1e-30
    %vm2153 = vcmp.lt.f32.partialorder %v2137, 1e-30
    %vm2154 = vcmp.lt.f32.partialorder %v2138, 1e-30
    %vm2155 = vcmp.lt.f32.partialorder %v2139, 1e-30
    %vm2156 = vcmp.lt.f32.partialorder %v2140, 1e-30
    %vm2157 = vcmp.lt.f32.partialorder %v2141, 1e-30
    %vm2158 = vcmp.lt.f32.partialorder %v2142, 1e-30
    %vm2159 = vcmp.lt.f32.partialorder %v2111, 0.0
    %vm2160 = vcmp.lt.f32.partialorder %v2112, 0.0
    %vm2161 = vcmp.lt.f32.partialorder %v2113, 0.0
    %vm2162 = vcmp.lt.f32.partialorder %v2114, 0.0
    %vm2163 = vcmp.lt.f32.partialorder %v2115, 0.0
    %vm2164 = vcmp.lt.f32.partialorder %v2116, 0.0
    %vm2165 = vcmp.lt.f32.partialorder %v2117, 0.0
    %vm2166 = vcmp.lt.f32.partialorder %v2118, 0.0
    %vm2167 = vcmp.lt.f32.partialorder %v2119, 0.0
    %vm2168 = vcmp.lt.f32.partialorder %v2120, 0.0
    %vm2169 = vcmp.lt.f32.partialorder %v2121, 0.0
    %vm2170 = vcmp.lt.f32.partialorder %v2122, 0.0
    %vm2171 = vcmp.lt.f32.partialorder %v2123, 0.0
    %vm2172 = vcmp.lt.f32.partialorder %v2124, 0.0
    %vm2173 = vcmp.lt.f32.partialorder %v2125, 0.0
    %vm2174 = vcmp.lt.f32.partialorder %v2126, 0.0
    %v2175 = vsel %vm2159, -1e-30, 1e-30
    %v2176 = vsel %vm2160, -1e-30, 1e-30
    %v2177 = vsel %vm2161, -1e-30, 1e-30
    %v2178 = vsel %vm2162, -1e-30, 1e-30
    %v2179 = vsel %vm2163, -1e-30, 1e-30
    %v2180 = vsel %vm2164, -1e-30, 1e-30
    %v2181 = vsel %vm2165, -1e-30, 1e-30
    %v2182 = vsel %vm2166, -1e-30, 1e-30
    %v2183 = vsel %vm2167, -1e-30, 1e-30
    %v2184 = vsel %vm2168, -1e-30, 1e-30
    %v2185 = vsel %vm2169, -1e-30, 1e-30
    %v2186 = vsel %vm2170, -1e-30, 1e-30
    %v2187 = vsel %vm2171, -1e-30, 1e-30
    %v2188 = vsel %vm2172, -1e-30, 1e-30
    %v2189 = vsel %vm2173, -1e-30, 1e-30
    %v2190 = vsel %vm2174, -1e-30, 1e-30
    %v2191 = vsel %vm2143, %v2175, %v2111
    %v2192 = vsel %vm2144, %v2176, %v2112
    %v2193 = vsel %vm2145, %v2177, %v2113
    %v2194 = vsel %vm2146, %v2178, %v2114
    %v2195 = vsel %vm2147, %v2179, %v2115
    %v2196 = vsel %vm2148, %v2180, %v2116
    %v2197 = vsel %vm2149, %v2181, %v2117
    %v2198 = vsel %vm2150, %v2182, %v2118
    %v2199 = vsel %vm2151, %v2183, %v2119
    %v2200 = vsel %vm2152, %v2184, %v2120
    %v2201 = vsel %vm2153, %v2185, %v2121
    %v2202 = vsel %vm2154, %v2186, %v2122
    %v2203 = vsel %vm2155, %v2187, %v2123
    %v2204 = vsel %vm2156, %v2188, %v2124
    %v2205 = vsel %vm2157, %v2189, %v2125
    %v2206 = vsel %vm2158, %v2190, %v2126
    %v2207 = vrcp.pop %v2191
    %v2208 = vmul.f32 %v2015, %v2207
    %v2209 = vrcp.pop %v2192
    %v2210 = vmul.f32 %v2016, %v2209
    %v2211 = vrcp.pop %v2193
    %v2212 = vmul.f32 %v2017, %v2211
    %v2213 = vrcp.pop %v2194
    %v2214 = vmul.f32 %v2018, %v2213
    %v2215 = vrcp.pop %v2195
    %v2216 = vmul.f32 %v2019, %v2215
    %v2217 = vrcp.pop %v2196
    %v2218 = vmul.f32 %v2020, %v2217
    %v2219 = vrcp.pop %v2197
    %v2220 = vmul.f32 %v2021, %v2219
    %v2221 = vrcp.pop %v2198
    %v2222 = vmul.f32 %v2022, %v2221
    %v2223 = vrcp.pop %v2199
    %v2224 = vmul.f32 %v2023, %v2223
    %v2225 = vrcp.pop %v2200
    %v2226 = vmul.f32 %v2024, %v2225
    %v2227 = vrcp.pop %v2201
    %v2228 = vmul.f32 %v2025, %v2227
    %v2229 = vrcp.pop %v2202
    %v2230 = vmul.f32 %v2026, %v2229
    %v2231 = vrcp.pop %v2203
    %v2232 = vmul.f32 %v2027, %v2231
    %v2233 = vrcp.pop %v2204
    %v2234 = vmul.f32 %v2028, %v2233
    %v2235 = vrcp.pop %v2205
    %v2236 = vmul.f32 %v2029, %v2235
    %v2237 = vrcp.pop %v2206
    %v2238 = vmul.f32 %v2030, %v2237
    %v2239 = vsub.f32 %v1903, %v2208
    %v2240 = vsub.f32 %v1904, %v2210
    %v2241 = vsub.f32 %v1905, %v2212
    %v2242 = vsub.f32 %v1906, %v2214
    %v2243 = vsub.f32 %v1907, %v2216
    %v2244 = vsub.f32 %v1908, %v2218
    %v2245 = vsub.f32 %v1909, %v2220
    %v2246 = vsub.f32 %v1910, %v2222
    %v2247 = vsub.f32 %v1911, %v2224
    %v2248 = vsub.f32 %v1912, %v2226
    %v2249 = vsub.f32 %v1913, %v2228
    %v2250 = vsub.f32 %v1914, %v2230
    %v2251 = vsub.f32 %v1915, %v2232
    %v2252 = vsub.f32 %v1916, %v2234
    %v2253 = vsub.f32 %v1917, %v2236
    %v2254 = vsub.f32 %v1918, %v2238
    %v2255 = vsel %vm479, %v847, %v2239
    %v2256 = vsel %vm480, %v848, %v2240
    %v2257 = vsel %vm481, %v849, %v2241
    %v2258 = vsel %vm482, %v850, %v2242
    %v2259 = vsel %vm483, %v851, %v2243
    %v2260 = vsel %vm484, %v852, %v2244
    %v2261 = vsel %vm485, %v853, %v2245
    %v2262 = vsel %vm486, %v854, %v2246
    %v2263 = vsel %vm487, %v855, %v2247
    %v2264 = vsel %vm488, %v856, %v2248
    %v2265 = vsel %vm489, %v857, %v2249
    %v2266 = vsel %vm490, %v858, %v2250
    %v2267 = vsel %vm491, %v859, %v2251
    %v2268 = vsel %vm492, %v860, %v2252
    %v2269 = vsel %vm493, %v861, %v2253
    %v2270 = vsel %vm494, %v862, %v2254
    %v2271 = vsub.f32 0.0, %v2255
    %v2272 = vsub.f32 0.0, %v2256
    %v2273 = vsub.f32 0.0, %v2257
    %v2274 = vsub.f32 0.0, %v2258
    %v2275 = vsub.f32 0.0, %v2259
    %v2276 = vsub.f32 0.0, %v2260
    %v2277 = vsub.f32 0.0, %v2261
    %v2278 = vsub.f32 0.0, %v2262
    %v2279 = vsub.f32 0.0, %v2263
    %v2280 = vsub.f32 0.0, %v2264
    %v2281 = vsub.f32 0.0, %v2265
    %v2282 = vsub.f32 0.0, %v2266
    %v2283 = vsub.f32 0.0, %v2267
    %v2284 = vsub.f32 0.0, %v2268
    %v2285 = vsub.f32 0.0, %v2269
    %v2286 = vsub.f32 0.0, %v2270
    %v2287 = vmul.f32 %v2271, 1.442695
    %v2288 = vpow.pop %v2287
    %v2289 = vmul.f32 %v2272, 1.442695
    %v2290 = vpow.pop %v2289
    %v2291 = vmul.f32 %v2273, 1.442695
    %v2292 = vpow.pop %v2291
    %v2293 = vmul.f32 %v2274, 1.442695
    %v2294 = vpow.pop %v2293
    %v2295 = vmul.f32 %v2275, 1.442695
    %v2296 = vpow.pop %v2295
    %v2297 = vmul.f32 %v2276, 1.442695
    %v2298 = vpow.pop %v2297
    %v2299 = vmul.f32 %v2277, 1.442695
    %v2300 = vpow.pop %v2299
    %v2301 = vmul.f32 %v2278, 1.442695
    %v2302 = vpow.pop %v2301
    %v2303 = vmul.f32 %v2279, 1.442695
    %v2304 = vpow.pop %v2303
    %v2305 = vmul.f32 %v2280, 1.442695
    %v2306 = vpow.pop %v2305
    %v2307 = vmul.f32 %v2281, 1.442695
    %v2308 = vpow.pop %v2307
    %v2309 = vmul.f32 %v2282, 1.442695
    %v2310 = vpow.pop %v2309
    %v2311 = vmul.f32 %v2283, 1.442695
    %v2312 = vpow.pop %v2311
    %v2313 = vmul.f32 %v2284, 1.442695
    %v2314 = vpow.pop %v2313
    %v2315 = vmul.f32 %v2285, 1.442695
    %v2316 = vpow.pop %v2315
    %v2317 = vmul.f32 %v2286, 1.442695
    %v2318 = vpow.pop %v2317
    %v2319 = vmul.f32 %v367, %v2288
    %v2320 = vmul.f32 %v368, %v2290
    %v2321 = vmul.f32 %v369, %v2292
    %v2322 = vmul.f32 %v370, %v2294
    %v2323 = vmul.f32 %v371, %v2296
    %v2324 = vmul.f32 %v372, %v2298
    %v2325 = vmul.f32 %v373, %v2300
    %v2326 = vmul.f32 %v374, %v2302
    %v2327 = vmul.f32 %v375, %v2304
    %v2328 = vmul.f32 %v376, %v2306
    %v2329 = vmul.f32 %v377, %v2308
    %v2330 = vmul.f32 %v378, %v2310
    %v2331 = vmul.f32 %v379, %v2312
    %v2332 = vmul.f32 %v380, %v2314
    %v2333 = vmul.f32 %v381, %v2316
    %v2334 = vmul.f32 %v382, %v2318
    %v2335 = vmul.f32 %v2255, %v2255
    %v2336 = vmul.f32 %v2256, %v2256
    %v2337 = vmul.f32 %v2257, %v2257
    %v2338 = vmul.f32 %v2258, %v2258
    %v2339 = vmul.f32 %v2259, %v2259
    %v2340 = vmul.f32 %v2260, %v2260
    %v2341 = vmul.f32 %v2261, %v2261
    %v2342 = vmul.f32 %v2262, %v2262
    %v2343 = vmul.f32 %v2263, %v2263
    %v2344 = vmul.f32 %v2264, %v2264
    %v2345 = vmul.f32 %v2265, %v2265
    %v2346 = vmul.f32 %v2266, %v2266
    %v2347 = vmul.f32 %v2267, %v2267
    %v2348 = vmul.f32 %v2268, %v2268
    %v2349 = vmul.f32 %v2269, %v2269
    %v2350 = vmul.f32 %v2270, %v2270
    %v2351 = vmul.f32 %v2335, 2.0
    %v2352 = vmul.f32 %v2336, 2.0
    %v2353 = vmul.f32 %v2337, 2.0
    %v2354 = vmul.f32 %v2338, 2.0
    %v2355 = vmul.f32 %v2339, 2.0
    %v2356 = vmul.f32 %v2340, 2.0
    %v2357 = vmul.f32 %v2341, 2.0
    %v2358 = vmul.f32 %v2342, 2.0
    %v2359 = vmul.f32 %v2343, 2.0
    %v2360 = vmul.f32 %v2344, 2.0
    %v2361 = vmul.f32 %v2345, 2.0
    %v2362 = vmul.f32 %v2346, 2.0
    %v2363 = vmul.f32 %v2347, 2.0
    %v2364 = vmul.f32 %v2348, 2.0
    %v2365 = vmul.f32 %v2349, 2.0
    %v2366 = vmul.f32 %v2350, 2.0
    %v2367 = vadd.f32 %v2319, %v2351
    %v2368 = vadd.f32 %v2320, %v2352
    %v2369 = vadd.f32 %v2321, %v2353
    %v2370 = vadd.f32 %v2322, %v2354
    %v2371 = vadd.f32 %v2323, %v2355
    %v2372 = vadd.f32 %v2324, %v2356
    %v2373 = vadd.f32 %v2325, %v2357
    %v2374 = vadd.f32 %v2326, %v2358
    %v2375 = vadd.f32 %v2327, %v2359
    %v2376 = vadd.f32 %v2328, %v2360
    %v2377 = vadd.f32 %v2329, %v2361
    %v2378 = vadd.f32 %v2330, %v2362
    %v2379 = vadd.f32 %v2331, %v2363
    %v2380 = vadd.f32 %v2332, %v2364
    %v2381 = vadd.f32 %v2333, %v2365
    %v2382 = vadd.f32 %v2334, %v2366
    %v2383 = vlaneseq
    %v2384 = vshrl.u32 %v2383, 7
    %s2385 = smul.u32 0, 128
    %v2386 = vmul.u32 %v2384, 128
    %v2387 = vstv %s2385
    %v2388 = vadd.s32 %v2387, %v2386
    %v2389 = vadd.s32 %v2388, %v190
    %vm2390 = vcmp.lt.s32.totalorder %v2389, 8
    %v2407 = vlaneseq
    %v2408 = vshrl.u32 %v2407, 7
    %v2409 = vsub.s32 %v190, %v2408
    %v2410 = vrot.slane %v2367, %v2409
    %v2411 = vadd.s32 %v190, 4294967288
    %v2412 = vlaneseq
    %v2413 = vshrl.u32 %v2412, 7
    %v2414 = vsub.s32 %v2411, %v2413
    %v2415 = vrot.slane %v2368, %v2414
    %vm2416 = vcmask 130112
    %v2417 = vsel %vm2416, %v2415, %v2410
    %v2418 = vadd.s32 %v190, 4294967280
    %v2419 = vlaneseq
    %v2420 = vshrl.u32 %v2419, 7
    %v2421 = vsub.s32 %v2418, %v2420
    %v2422 = vrot.slane %v2369, %v2421
    %vm2423 = vcmask 195712
    %v2424 = vsel %vm2423, %v2422, %v2417
    %v2425 = vadd.s32 %v190, 4294967272
    %v2426 = vlaneseq
    %v2427 = vshrl.u32 %v2426, 7
    %v2428 = vsub.s32 %v2425, %v2427
    %v2429 = vrot.slane %v2370, %v2428
    %vm2430 = vcmask 261312
    %v2431 = vsel %vm2430, %v2429, %v2424
    %v2432 = vadd.s32 %v190, 4294967264
    %v2433 = vlaneseq
    %v2434 = vshrl.u32 %v2433, 7
    %v2435 = vsub.s32 %v2432, %v2434
    %v2436 = vrot.slane %v2371, %v2435
    %vm2437 = vcmask 326912
    %v2438 = vsel %vm2437, %v2436, %v2431
    %v2439 = vadd.s32 %v190, 4294967256
    %v2440 = vlaneseq
    %v2441 = vshrl.u32 %v2440, 7
    %v2442 = vsub.s32 %v2439, %v2441
    %v2443 = vrot.slane %v2372, %v2442
    %vm2444 = vcmask 392512
    %v2445 = vsel %vm2444, %v2443, %v2438
    %v2446 = vadd.s32 %v190, 4294967248
    %v2447 = vlaneseq
    %v2448 = vshrl.u32 %v2447, 7
    %v2449 = vsub.s32 %v2446, %v2448
    %v2450 = vrot.slane %v2373, %v2449
    %vm2451 = vcmask 458112
    %v2452 = vsel %vm2451, %v2450, %v2445
    %v2453 = vadd.s32 %v190, 4294967240
    %v2454 = vlaneseq
    %v2455 = vshrl.u32 %v2454, 7
    %v2456 = vsub.s32 %v2453, %v2455
    %v2457 = vrot.slane %v2374, %v2456
    %vm2458 = vcmask 523712
    %v2459 = vsel %vm2458, %v2457, %v2452
    %v2460 = vadd.s32 %v190, 4294967232
    %v2461 = vlaneseq
    %v2462 = vshrl.u32 %v2461, 7
    %v2463 = vsub.s32 %v2460, %v2462
    %v2464 = vrot.slane %v2375, %v2463
    %vm2465 = vcmask 589312
    %v2466 = vsel %vm2465, %v2464, %v2459
    %v2467 = vadd.s32 %v190, 4294967224
    %v2468 = vlaneseq
    %v2469 = vshrl.u32 %v2468, 7
    %v2470 = vsub.s32 %v2467, %v2469
    %v2471 = vrot.slane %v2376, %v2470
    %vm2472 = vcmask 654912
    %v2473 = vsel %vm2472, %v2471, %v2466
    %v2474 = vadd.s32 %v190, 4294967216
    %v2475 = vlaneseq
    %v2476 = vshrl.u32 %v2475, 7
    %v2477 = vsub.s32 %v2474, %v2476
    %v2478 = vrot.slane %v2377, %v2477
    %vm2479 = vcmask 720512
    %v2480 = vsel %vm2479, %v2478, %v2473
    %v2481 = vadd.s32 %v190, 4294967208
    %v2482 = vlaneseq
    %v2483 = vshrl.u32 %v2482, 7
    %v2484 = vsub.s32 %v2481, %v2483
    %v2485 = vrot.slane %v2378, %v2484
    %vm2486 = vcmask 786112
    %v2487 = vsel %vm2486, %v2485, %v2480
    %v2488 = vadd.s32 %v190, 4294967200
    %v2489 = vlaneseq
    %v2490 = vshrl.u32 %v2489, 7
    %v2491 = vsub.s32 %v2488, %v2490
    %v2492 = vrot.slane %v2379, %v2491
    %vm2493 = vcmask 851712
    %v2494 = vsel %vm2493, %v2492, %v2487
    %v2495 = vadd.s32 %v190, 4294967192
    %v2496 = vlaneseq
    %v2497 = vshrl.u32 %v2496, 7
    %v2498 = vsub.s32 %v2495, %v2497
    %v2499 = vrot.slane %v2380, %v2498
    %vm2500 = vcmask 917312
    %v2501 = vsel %vm2500, %v2499, %v2494
    %v2502 = vadd.s32 %v190, 4294967184
    %v2503 = vlaneseq
    %v2504 = vshrl.u32 %v2503, 7
    %v2505 = vsub.s32 %v2502, %v2504
    %v2506 = vrot.slane %v2381, %v2505
    %vm2507 = vcmask 982912
    %v2508 = vsel %vm2507, %v2506, %v2501
    %v2509 = vadd.s32 %v190, 4294967176
    %v2510 = vlaneseq
    %v2511 = vshrl.u32 %v2510, 7
    %v2512 = vsub.s32 %v2509, %v2511
    %v2513 = vrot.slane %v2382, %v2512
    %vm2514 = vcmask 1048512
    %v2515 = vsel %vm2514, %v2513, %v2508
    %v2517 = vsel %vm2390, %v2515, 0.0
    %v2518 = vadd.f32 %v2517, 0.0
    %v2519 = vmul.f32 %v2518, 0.125
    %vm2520 = vcmp.eq.s32.totalorder %v2384, 0
    %v2521 = vlaneseq
    %v2522 = vshrl.u32 %v2521, 7
    %v2523 = vsub.s32 0, %v2522
    %v2524 = vrot.slane %v2519, %v2523
    %v2525 = vsel %vm2520, %v2524, 0.0
    %2526 = vst [vmem:[#allocation2] sm:$0xff] %v2525
    // Predicated region
    $region10: #{tpu_custom_call.1} parent=1 // pred_check
      _
    $region11: #{tpu_custom_call.1} parent=1 // pred_check_branch
      %2528 = sbr.rel (0) target = $region13
    $region12: #{tpu_custom_call.1} parent=1 // pred_region
      %s2530 = ssub.s32 128, 128
      %2531 = vsyncadd [#allocation3], %s2530
      %s2533 = sshll.u32 [#allocation2], 4
      %s2534 = int_to_ptr.vmem [resolvable:$true] %s2533
      %2536 = dma.vmem_to_hbm [thread:$0]  %s2534, 128, %s2, [#allocation3]
    $region13: #{tpu_custom_call.1} parent=1 // pred_fallthru
      _
    // Predicated region
    $region14: #{tpu_custom_call.1} parent=1 // pred_check
      _
    $region15: #{tpu_custom_call.1} parent=1 // pred_check_branch
      %2538 = sbr.rel (0) target = $region17
    $region16: #{tpu_custom_call.1} parent=1 // pred_region
      %2539 = dma.done [#allocation3], 128
    $region17: #{tpu_custom_call.1} parent=1 // pred_fallthru
      _
    %2540 = vsyncpa [#allocation3], 1

</llo_original>
